<compile_context>
chip_gen: v5e
topology: v5e:2x2
jax: 0.10.0
libtpu: 0.0.40
codegen_flags: <defaults>
</compile_context>

<pallas_src>
import functools
import math

import jax
import jax.numpy as jnp
from jax import lax
from jax.experimental import pallas as pl
from jax.experimental.pallas import tpu as pltpu

IN_DIM = 28 * 28            # 784
HIDDEN_DIM = 128
N_LAYERS = 2
OUT_DIM = 10
OUT_PAD = 128               # lane-dense padded output width
TM_MAX = 1024               # largest batch tile (keeps VMEM well under limits)


def _round_up(x, m):
    return (x + m - 1) // m * m


def _gelu_erf(x):
    # nn.GELU() default (exact erf form).
    return 0.5 * x * (1.0 + lax.erf(x * (1.0 / math.sqrt(2.0))))


def _gelu_tanh(x):
    # tanh approximation: routes the transcendental to the (otherwise idle) EUP.
    c = math.sqrt(2.0 / math.pi)
    return 0.5 * x * (1.0 + jnp.tanh(c * (x + 0.044715 * (x * x * x))))


def simple_mlp_kernel(x_ref, w_in_ref, b_in_ref, w_h_ref, b_h_ref,
                      w_out_ref, b_out_ref, o_ref, *, n_layers, approx_gelu):
    gelu = _gelu_tanh if approx_gelu else _gelu_erf

    # in_layer: Linear(784->H) + GELU. bf16 MXU operands, f32 accumulation.
    x = x_ref[...]                                            # (TM, 784)
    if x.dtype != jnp.bfloat16:
        x = x.astype(jnp.bfloat16)
    h = jnp.dot(x, w_in_ref[...], preferred_element_type=jnp.float32)
    h = gelu(h + b_in_ref[...])                               # (TM, H) f32

    # hidden MLPLayers: Linear(H->H) + residual + GELU (dropout p=0 no-op).
    # Static unroll is fine for n_layers=2.
    for l in range(n_layers):
        y = jnp.dot(h.astype(jnp.bfloat16), w_h_ref[l],
                    preferred_element_type=jnp.float32)
        h = gelu(y + b_h_ref[l] + h)

    # out_layer: Linear(H -> 128 padded) -> lane-dense bf16 store.
    out = jnp.dot(h.astype(jnp.bfloat16), w_out_ref[...],
                  preferred_element_type=jnp.float32)
    o_ref[...] = (out + b_out_ref[...]).astype(o_ref.dtype)


def init_params(key, hidden_dim=HIDDEN_DIM, n_layers=N_LAYERS):
    """Logical (unpadded, f32) parameters, matching the PyTorch module."""
    ks = jax.random.split(key, 6)
    scale = 0.02
    w_in = scale * jax.random.normal(ks[0], (IN_DIM, hidden_dim), jnp.float32)
    b_in = scale * jax.random.normal(ks[1], (1, hidden_dim), jnp.float32)
    w_h = scale * jax.random.normal(ks[2], (n_layers, hidden_dim, hidden_dim),
                                    jnp.float32)
    b_h = scale * jax.random.normal(ks[3], (n_layers, 1, hidden_dim),
                                    jnp.float32)
    w_out = scale * jax.random.normal(ks[4], (hidden_dim, OUT_DIM), jnp.float32)
    b_out = scale * jax.random.normal(ks[5], (1, OUT_DIM), jnp.float32)
    return (w_in, b_in, w_h, b_h, w_out, b_out)


def prepare_params(params):
    """Cast weights to bf16 and pad the output projection 10 -> 128 cols."""
    w_in, b_in, w_h, b_h, w_out, b_out = params
    w_in_p = w_in.astype(jnp.bfloat16)                        # (784, H), no K pad
    w_h_p = w_h.astype(jnp.bfloat16)
    w_out_p = jnp.pad(w_out, ((0, 0), (0, OUT_PAD - OUT_DIM))).astype(jnp.bfloat16)
    b_out_p = jnp.pad(b_out, ((0, 0), (0, OUT_PAD - OUT_DIM)))  # f32, zero pad
    return (w_in_p, b_in, w_h_p, b_h, w_out_p, b_out_p)


def _choose_tm(batch, tm_max=TM_MAX):
    """Pick the batch tile.

    * small batches: one tile (no per-step grid overhead),
    * otherwise >= 4 grid steps (>= 2 per v7x TensorCore so prologue/epilogue
      DMA overlaps) with tiles growing toward `tm_max` rows for large batches,
    * prefer a tile that divides the batch so the wrapper never materializes a
      padded HBM copy of x.
    All tiles are multiples of 16 (bf16 output sublane packing).
    """
    b16 = _round_up(max(batch, 1), 16)
    if b16 <= 256:
        return b16
    tm = min(tm_max, _round_up(b16 // 4, 16))
    cand = tm
    while cand >= max(16, tm // 2):
        if b16 % cand == 0:
            return cand
        cand -= 16
    return tm


def simple_mlp_forward(x, prepared_params, *, tm_max=TM_MAX,
                       approximate_gelu=True):
    w_in, b_in, w_h, b_h, w_out, b_out = prepared_params
    n_layers = w_h.shape[0]
    hd = w_in.shape[1]
    batch, in_dim = x.shape
    assert in_dim == w_in.shape[0]

    tm = _choose_tm(batch, tm_max)
    b_pad = _round_up(batch, tm)
    # Only materialize a padded copy of x when the tile does not divide the
    # batch (jnp.pad is a full HBM copy, not a view).
    x_in = x if b_pad == batch else jnp.pad(x, ((0, b_pad - batch), (0, 0)))

    grid = (b_pad // tm,)

    flops = 2 * b_pad * (in_dim * hd + n_layers * hd * hd + hd * OUT_PAD)
    transcendentals = b_pad * hd * (1 + n_layers)              # tanh/erf calls
    bytes_accessed = (x_in.size * x_in.dtype.itemsize
                      + (w_in.size + w_h.size + w_out.size) * 2   # bf16 weights
                      + (b_in.size + b_h.size + b_out.size) * 4   # f32 biases
                      + b_pad * OUT_PAD * 2)                      # bf16 output

    out = pl.pallas_call(
        functools.partial(simple_mlp_kernel, n_layers=n_layers,
                          approx_gelu=approximate_gelu),
        out_shape=jax.ShapeDtypeStruct((b_pad, OUT_PAD), jnp.bfloat16),
        grid_spec=pltpu.PrefetchScalarGridSpec(
            num_scalar_prefetch=0,
            grid=grid,
            in_specs=[
                # x tile at its natural 784 width (last dim == full array dim),
                # pipelined over the batch grid axis.
                pl.BlockSpec((tm, in_dim), lambda i: (i, 0)),
                # Weights/biases: constant index_map -> stay VMEM-resident.
                # (pipeline_mode=pl.Buffered(1) would reclaim ~0.4 MiB of dead
                #  double-buffer VMEM; left at the default for robustness.)
                pl.BlockSpec((in_dim, hd), lambda i: (0, 0)),
                pl.BlockSpec((1, hd), lambda i: (0, 0)),
                pl.BlockSpec((n_layers, hd, hd), lambda i: (0, 0, 0)),
                pl.BlockSpec((n_layers, 1, hd), lambda i: (0, 0, 0)),
                pl.BlockSpec((hd, OUT_PAD), lambda i: (0, 0)),
                pl.BlockSpec((1, OUT_PAD), lambda i: (0, 0)),
            ],
            out_specs=pl.BlockSpec((tm, OUT_PAD), lambda i: (i, 0)),
        ),
        compiler_params=pltpu.CompilerParams(
            dimension_semantics=("parallel",),      # megacore on v7x
            vmem_limit_bytes=32 * 1024 * 1024,      # fits v7x scoped VMEM
        ),
        cost_estimate=pl.CostEstimate(
            flops=flops,
            transcendentals=transcendentals,
            bytes_accessed=bytes_accessed,
        ),
    )(x_in, w_in, b_in, w_h, b_h, w_out, b_out)

    return out[:batch, :OUT_DIM].astype(jnp.float32)


def reference_forward_prepared(x, prepared_params, *, approximate_gelu=True):
    """Pure-JAX reference with the same bf16 weights / f32 accumulation /
    bf16 output rounding as the kernel."""
    gelu = _gelu_tanh if approximate_gelu else _gelu_erf
    w_in, b_in, w_h, b_h, w_out, b_out = prepared_params
    h = gelu(jnp.dot(x.astype(jnp.bfloat16), w_in,
                     preferred_element_type=jnp.float32) + b_in)
    for l in range(w_h.shape[0]):
        y = jnp.dot(h.astype(jnp.bfloat16), w_h[l],
                    preferred_element_type=jnp.float32)
        h = gelu(y + b_h[l] + h)
    out = jnp.dot(h.astype(jnp.bfloat16), w_out,
                  preferred_element_type=jnp.float32) + b_out
    return out[:, :OUT_DIM].astype(jnp.bfloat16).astype(jnp.float32)


def reference_forward_f32(x, params):
    """Full-f32 exact-erf reference of the original module (semantic check)."""
    w_in, b_in, w_h, b_h, w_out, b_out = params
    h = _gelu_erf(x @ w_in + b_in)
    for l in range(w_h.shape[0]):
        h = _gelu_erf(h @ w_h[l] + b_h[l] + h)
    return h @ w_out + b_out


if __name__ == "__main__":
    key = jax.random.PRNGKey(0)
    k_x, k_p = jax.random.split(key)

    BATCH = 320   # small, but exercises a 4-step batch grid (tile = 80 rows)
    x = jax.random.normal(k_x, (BATCH, IN_DIM), jnp.float32)
    params = init_params(k_p)
    prepared = prepare_params(params)

    out = simple_mlp_forward(x, prepared)
    out = jax.block_until_ready(out)
    assert out.shape == (BATCH, OUT_DIM)

    # Exact-model check: same bf16 weights / tanh GELU / f32 accumulation /
    # bf16 output rounding as the kernel (diffs are matmul-order only).
    ref_bf16 = reference_forward_prepared(x, prepared)
    assert jnp.allclose(out, ref_bf16, atol=5e-3, rtol=5e-3), \
        "mismatch vs bf16-weight reference"

    # Semantic check vs the original full-f32 module (exact erf GELU).
    # Tolerance covers bf16 weight/output quantization + tanh-GELU approx.
    ref_f32 = reference_forward_f32(x, params)
    assert jnp.allclose(out, ref_f32, atol=2e-2, rtol=2e-2), \
        "mismatch vs f32 reference"

    print("KERNEL_OK")
</pallas_src>

<mosaic_0001>
module attributes {stable_mosaic.version = 11 : i64} {
  func.func @simple_mlp_kernel(%arg0: i32, %arg1: memref<80x784xf32, #tpu.memory_space<vmem>>, %arg2: memref<784x128xbf16, #tpu.memory_space<vmem>>, %arg3: memref<1x128xf32, #tpu.memory_space<vmem>>, %arg4: memref<2x128x128xbf16, #tpu.memory_space<vmem>>, %arg5: memref<2x1x128xf32, #tpu.memory_space<vmem>>, %arg6: memref<128x128xbf16, #tpu.memory_space<vmem>>, %arg7: memref<1x128xf32, #tpu.memory_space<vmem>>, %arg8: memref<80x128xbf16, #tpu.memory_space<vmem>>) attributes {dimension_semantics = [#tpu.dimension_semantics<parallel>], iteration_bounds = array<i64: 4>, scalar_prefetch = 0 : i64, scratch_operands = 0 : i64, tpu.core_type = #tpu.core_type<tc>, window_params = [{transform_indices = @transform_0, window_bounds = array<i64: 80, 784>}, {pipeline_mode = #tpu.pipeline_mode<synchronous>, transform_indices = @transform_1, window_bounds = array<i64: 784, 128>}, {pipeline_mode = #tpu.pipeline_mode<synchronous>, transform_indices = @transform_2, window_bounds = array<i64: 1, 128>}, {pipeline_mode = #tpu.pipeline_mode<synchronous>, transform_indices = @transform_3, window_bounds = array<i64: 2, 128, 128>}, {pipeline_mode = #tpu.pipeline_mode<synchronous>, transform_indices = @transform_4, window_bounds = array<i64: 2, 1, 128>}, {pipeline_mode = #tpu.pipeline_mode<synchronous>, transform_indices = @transform_5, window_bounds = array<i64: 128, 128>}, {pipeline_mode = #tpu.pipeline_mode<synchronous>, transform_indices = @transform_6, window_bounds = array<i64: 1, 128>}, {transform_indices = @transform_7, window_bounds = array<i64: 80, 128>}]} {
    %c0 = arith.constant 0 : index
    %c0_0 = arith.constant 0 : index
    %0 = vector.load %arg1[%c0, %c0_0] : memref<80x784xf32, #tpu.memory_space<vmem>>, vector<80x784xf32>
    %1 = arith.truncf %0 : vector<80x784xf32> to vector<80x784xbf16>
    %c0_1 = arith.constant 0 : index
    %c0_2 = arith.constant 0 : index
    %2 = vector.load %arg2[%c0_1, %c0_2] : memref<784x128xbf16, #tpu.memory_space<vmem>>, vector<784x128xbf16>
    %cst = arith.constant dense<0.000000e+00> : vector<80x128xf32>
    %3 = tpu.matmul %1, %2, %cst {dimension_numbers = #tpu.dot_dimension_numbers<[1], [0], [0], [1], [0, 0, 1, 1], [], []>} : vector<80x784xbf16>, vector<784x128xbf16>, vector<80x128xf32> -> vector<80x128xf32>
    %c0_3 = arith.constant 0 : index
    %c0_4 = arith.constant 0 : index
    %4 = vector.load %arg3[%c0_3, %c0_4] : memref<1x128xf32, #tpu.memory_space<vmem>>, vector<1x128xf32>
    %5 = vector.broadcast %4 : vector<1x128xf32> to vector<80x128xf32>
    %6 = arith.addf %3, %5 : vector<80x128xf32>
    %cst_5 = arith.constant 5.000000e-01 : f32
    %7 = vector.broadcast %cst_5 : f32 to vector<80x128xf32>
    %8 = arith.mulf %7, %6 : vector<80x128xf32>
    %9 = arith.mulf %6, %6 : vector<80x128xf32>
    %10 = arith.mulf %9, %6 : vector<80x128xf32>
    %cst_6 = arith.constant 4.471500e-02 : f32
    %11 = vector.broadcast %cst_6 : f32 to vector<80x128xf32>
    %12 = arith.mulf %11, %10 : vector<80x128xf32>
    %13 = arith.addf %6, %12 : vector<80x128xf32>
    %cst_7 = arith.constant 0.797884583 : f32
    %14 = vector.broadcast %cst_7 : f32 to vector<80x128xf32>
    %15 = arith.mulf %14, %13 : vector<80x128xf32>
    %16 = math.tanh %15 : vector<80x128xf32>
    %cst_8 = arith.constant 1.000000e+00 : f32
    %17 = vector.broadcast %cst_8 : f32 to vector<80x128xf32>
    %18 = arith.addf %17, %16 : vector<80x128xf32>
    %19 = arith.mulf %8, %18 : vector<80x128xf32>
    %20 = arith.truncf %19 : vector<80x128xf32> to vector<80x128xbf16>
    %c0_9 = arith.constant 0 : index
    %c0_10 = arith.constant 0 : index
    %c0_11 = arith.constant 0 : index
    %21 = vector.load %arg4[%c0_9, %c0_10, %c0_11] : memref<2x128x128xbf16, #tpu.memory_space<vmem>>, vector<1x128x128xbf16>
    %22 = vector.shape_cast %21 : vector<1x128x128xbf16> to vector<128x128xbf16>
    %cst_12 = arith.constant dense<0.000000e+00> : vector<80x128xf32>
    %23 = tpu.matmul %20, %22, %cst_12 {dimension_numbers = #tpu.dot_dimension_numbers<[1], [0], [0], [1], [0, 0, 1, 1], [], []>} : vector<80x128xbf16>, vector<128x128xbf16>, vector<80x128xf32> -> vector<80x128xf32>
    %c0_13 = arith.constant 0 : index
    %c0_14 = arith.constant 0 : index
    %c0_15 = arith.constant 0 : index
    %24 = vector.load %arg5[%c0_13, %c0_14, %c0_15] : memref<2x1x128xf32, #tpu.memory_space<vmem>>, vector<1x1x128xf32>
    %25 = vector.shape_cast %24 : vector<1x1x128xf32> to vector<1x128xf32>
    %26 = vector.broadcast %25 : vector<1x128xf32> to vector<80x128xf32>
    %27 = arith.addf %23, %26 : vector<80x128xf32>
    %28 = arith.addf %27, %19 : vector<80x128xf32>
    %cst_16 = arith.constant 5.000000e-01 : f32
    %29 = vector.broadcast %cst_16 : f32 to vector<80x128xf32>
    %30 = arith.mulf %29, %28 : vector<80x128xf32>
    %31 = arith.mulf %28, %28 : vector<80x128xf32>
    %32 = arith.mulf %31, %28 : vector<80x128xf32>
    %cst_17 = arith.constant 4.471500e-02 : f32
    %33 = vector.broadcast %cst_17 : f32 to vector<80x128xf32>
    %34 = arith.mulf %33, %32 : vector<80x128xf32>
    %35 = arith.addf %28, %34 : vector<80x128xf32>
    %cst_18 = arith.constant 0.797884583 : f32
    %36 = vector.broadcast %cst_18 : f32 to vector<80x128xf32>
    %37 = arith.mulf %36, %35 : vector<80x128xf32>
    %38 = math.tanh %37 : vector<80x128xf32>
    %cst_19 = arith.constant 1.000000e+00 : f32
    %39 = vector.broadcast %cst_19 : f32 to vector<80x128xf32>
    %40 = arith.addf %39, %38 : vector<80x128xf32>
    %41 = arith.mulf %30, %40 : vector<80x128xf32>
    %42 = arith.truncf %41 : vector<80x128xf32> to vector<80x128xbf16>
    %c1 = arith.constant 1 : index
    %c0_20 = arith.constant 0 : index
    %c0_21 = arith.constant 0 : index
    %43 = vector.load %arg4[%c1, %c0_20, %c0_21] : memref<2x128x128xbf16, #tpu.memory_space<vmem>>, vector<1x128x128xbf16>
    %44 = vector.shape_cast %43 : vector<1x128x128xbf16> to vector<128x128xbf16>
    %cst_22 = arith.constant dense<0.000000e+00> : vector<80x128xf32>
    %45 = tpu.matmul %42, %44, %cst_22 {dimension_numbers = #tpu.dot_dimension_numbers<[1], [0], [0], [1], [0, 0, 1, 1], [], []>} : vector<80x128xbf16>, vector<128x128xbf16>, vector<80x128xf32> -> vector<80x128xf32>
    %c1_23 = arith.constant 1 : index
    %c0_24 = arith.constant 0 : index
    %c0_25 = arith.constant 0 : index
    %46 = vector.load %arg5[%c1_23, %c0_24, %c0_25] : memref<2x1x128xf32, #tpu.memory_space<vmem>>, vector<1x1x128xf32>
    %47 = vector.shape_cast %46 : vector<1x1x128xf32> to vector<1x128xf32>
    %48 = vector.broadcast %47 : vector<1x128xf32> to vector<80x128xf32>
    %49 = arith.addf %45, %48 : vector<80x128xf32>
    %50 = arith.addf %49, %41 : vector<80x128xf32>
    %cst_26 = arith.constant 5.000000e-01 : f32
    %51 = vector.broadcast %cst_26 : f32 to vector<80x128xf32>
    %52 = arith.mulf %51, %50 : vector<80x128xf32>
    %53 = arith.mulf %50, %50 : vector<80x128xf32>
    %54 = arith.mulf %53, %50 : vector<80x128xf32>
    %cst_27 = arith.constant 4.471500e-02 : f32
    %55 = vector.broadcast %cst_27 : f32 to vector<80x128xf32>
    %56 = arith.mulf %55, %54 : vector<80x128xf32>
    %57 = arith.addf %50, %56 : vector<80x128xf32>
    %cst_28 = arith.constant 0.797884583 : f32
    %58 = vector.broadcast %cst_28 : f32 to vector<80x128xf32>
    %59 = arith.mulf %58, %57 : vector<80x128xf32>
    %60 = math.tanh %59 : vector<80x128xf32>
    %cst_29 = arith.constant 1.000000e+00 : f32
    %61 = vector.broadcast %cst_29 : f32 to vector<80x128xf32>
    %62 = arith.addf %61, %60 : vector<80x128xf32>
    %63 = arith.mulf %52, %62 : vector<80x128xf32>
    %64 = arith.truncf %63 : vector<80x128xf32> to vector<80x128xbf16>
    %c0_30 = arith.constant 0 : index
    %c0_31 = arith.constant 0 : index
    %65 = vector.load %arg6[%c0_30, %c0_31] : memref<128x128xbf16, #tpu.memory_space<vmem>>, vector<128x128xbf16>
    %cst_32 = arith.constant dense<0.000000e+00> : vector<80x128xf32>
    %66 = tpu.matmul %64, %65, %cst_32 {dimension_numbers = #tpu.dot_dimension_numbers<[1], [0], [0], [1], [0, 0, 1, 1], [], []>} : vector<80x128xbf16>, vector<128x128xbf16>, vector<80x128xf32> -> vector<80x128xf32>
    %c0_33 = arith.constant 0 : index
    %c0_34 = arith.constant 0 : index
    %67 = vector.load %arg7[%c0_33, %c0_34] : memref<1x128xf32, #tpu.memory_space<vmem>>, vector<1x128xf32>
    %68 = vector.broadcast %67 : vector<1x128xf32> to vector<80x128xf32>
    %69 = arith.addf %66, %68 : vector<80x128xf32>
    %70 = arith.truncf %69 : vector<80x128xf32> to vector<80x128xbf16>
    %c0_35 = arith.constant 0 : index
    %c0_36 = arith.constant 0 : index
    %71 = vector.load %arg8[%c0_35, %c0_36] : memref<80x128xbf16, #tpu.memory_space<vmem>>, vector<80x128xbf16>
    tpu.vector_store %arg8[%c0_35, %c0_36], %70 {strides = array<i32>} : memref<80x128xbf16, #tpu.memory_space<vmem>>, vector<80x128xbf16>,
    return
  }
  func.func @transform_0(%arg0: i32) -> (i32, i32) {
    %c0_i32 = arith.constant 0 : i32
    %c0_i32_0 = arith.constant 0 : i32
    return %arg0, %c0_i32 : i32, i32
  }
  func.func @transform_1(%arg0: i32) -> (i32, i32) {
    %c0_i32 = arith.constant 0 : i32
    %c0_i32_0 = arith.constant 0 : i32
    %c0_i32_1 = arith.constant 0 : i32
    return %c0_i32, %c0_i32_0 : i32, i32
  }
  func.func @transform_2(%arg0: i32) -> (i32, i32) {
    %c0_i32 = arith.constant 0 : i32
    %c0_i32_0 = arith.constant 0 : i32
    %c0_i32_1 = arith.constant 0 : i32
    return %c0_i32, %c0_i32_0 : i32, i32
  }
  func.func @transform_3(%arg0: i32) -> (i32, i32, i32) {
    %c0_i32 = arith.constant 0 : i32
    %c0_i32_0 = arith.constant 0 : i32
    %c0_i32_1 = arith.constant 0 : i32
    %c0_i32_2 = arith.constant 0 : i32
    return %c0_i32, %c0_i32_0, %c0_i32_1 : i32, i32, i32
  }
  func.func @transform_4(%arg0: i32) -> (i32, i32, i32) {
    %c0_i32 = arith.constant 0 : i32
    %c0_i32_0 = arith.constant 0 : i32
    %c0_i32_1 = arith.constant 0 : i32
    %c0_i32_2 = arith.constant 0 : i32
    return %c0_i32, %c0_i32_0, %c0_i32_1 : i32, i32, i32
  }
  func.func @transform_5(%arg0: i32) -> (i32, i32) {
    %c0_i32 = arith.constant 0 : i32
    %c0_i32_0 = arith.constant 0 : i32
    %c0_i32_1 = arith.constant 0 : i32
    return %c0_i32, %c0_i32_0 : i32, i32
  }
  func.func @transform_6(%arg0: i32) -> (i32, i32) {
    %c0_i32 = arith.constant 0 : i32
    %c0_i32_0 = arith.constant 0 : i32
    %c0_i32_1 = arith.constant 0 : i32
    return %c0_i32, %c0_i32_0 : i32, i32
  }
  func.func @transform_7(%arg0: i32) -> (i32, i32) {
    %c0_i32 = arith.constant 0 : i32
    %c0_i32_0 = arith.constant 0 : i32
    return %arg0, %c0_i32 : i32, i32
  }
}

</mosaic_0001>

<llo_original>
// kernel: tpu_custom_call.1
$region0: #{tpu_custom_call.1}
  #allocation0 [shape = 'u32[]', space=smem, size = 0x4, offset = 0x4, fixed_abs, tag = 'smem constant byte address 0x4 - core index']
  #allocation1 [shape = 'u32[72,128]{1,0:T(1,128)}', space=vmem, size = 0x9000, scoped, tag = 'internal scratch']
  %s0 = inlined_call_operand.hbm [shape: f32[320,784], index: 0, kind: input, shape index: {}]
  %s1 = inlined_call_operand.hbm [shape: bf16[784,128], index: 1, kind: input, shape index: {}]
  %s2 = inlined_call_operand.hbm [shape: f32[1,128], index: 2, kind: input, shape index: {}]
  %s3 = inlined_call_operand.hbm [shape: bf16[2,128,128], index: 3, kind: input, shape index: {}]
  %s4 = inlined_call_operand.hbm [shape: f32[2,1,128], index: 4, kind: input, shape index: {}]
  %s5 = inlined_call_operand.hbm [shape: bf16[128,128], index: 5, kind: input, shape index: {}]
  %s6 = inlined_call_operand.hbm [shape: f32[1,128], index: 6, kind: input, shape index: {}]
  %s7 = inlined_call_operand.hbm [shape: bf16[320,128], index: 7, kind: output, shape index: {}]
  %s8 = sld [smem:[#allocation0]]
  $region89: #{tpu_custom_call.1} parent=0
    _
  %s10 = ssub.s32 1, %s8
  %s11 = scalar_select 0, %s10, %s8
  $region1: #{tpu_custom_call.1} parent=0
    #allocation2 [shape = 'u8[573440]{0}', space=vmem, size = 0x8c000, scoped, tag = 'input window, operand 0']
    #allocation3 [shape = 's32[2]{0}', space=sflag, size = 0x8, scoped, tag = 'scoped memory for tpu_custom_call.1']
    #allocation4 [shape = 's32[2]{0}', space=sflag, size = 0x8, scoped, tag = 'scoped memory for tpu_custom_call.1']
    #allocation5 [shape = 'u8[200704]{0}', space=vmem, size = 0x31000, scoped, tag = 'input window, operand 1, single buffered']
    #allocation6 [shape = 's32[1]{0}', space=sflag, size = 0x4, scoped, tag = 'scoped memory for tpu_custom_call.1']
    #allocation7 [shape = 'u8[512]{0}', space=vmem, size = 0x400, scoped, tag = 'input window, operand 2, single buffered']
    #allocation8 [shape = 'u8[65536]{0}', space=vmem, size = 0x10000, scoped, tag = 'input window, operand 3, single buffered']
    #allocation9 [shape = 's32[1]{0}', space=sflag, size = 0x4, scoped, tag = 'scoped memory for tpu_custom_call.1']
    #allocation10 [shape = 'u8[1024]{0}', space=vmem, size = 0x400, scoped, tag = 'input window, operand 4, single buffered']
    #allocation11 [shape = 'u8[32768]{0}', space=vmem, size = 0x8000, scoped, tag = 'input window, operand 5, single buffered']
    #allocation12 [shape = 's32[1]{0}', space=sflag, size = 0x4, scoped, tag = 'scoped memory for tpu_custom_call.1']
    #allocation13 [shape = 'u8[512]{0}', space=vmem, size = 0x400, scoped, tag = 'input window, operand 6, single buffered']
    #allocation14 [shape = 'u8[40960]{0}', space=vmem, size = 0xa000, scoped, tag = 'output window, operand 0']
    %12 = vsyncpa [#allocation3], 0
    %s13 = scalar_lea.sflag [#allocation3], 1
    %14 = vsyncpa %s13, 0
    %15 = vsyncpa [#allocation6], 0
    %16 = vsyncpa [#allocation9], 0
    %17 = vsyncpa [#allocation12], 0
    %18 = vsyncpa [#allocation4], 0
    %s19 = scalar_lea.sflag [#allocation4], 1
    %20 = vsyncpa %s19, 0
    loop: start=0, step=1, limit=6
    $region2: #{tpu_custom_call.1} parent=1 // loop_pre_header
      _
    $region3: #{tpu_custom_call.1} parent=1 // loop_header
      %s22 = sphi 0, %s26
      %p23 = scmp.ge.s32.totalorder %s22, 6
      %s32 = sphi 0, %s34
      %s35 = sphi 0, %s32
      %s36 = sphi 0, %s35
      %s52 = sphi 0, %s36
      %s56 = sphi 0, %s56
      %s58 = sphi 0, %s56
      %s59 = sphi 0, %s58
      %s73 = sphi 0, %s59
      %s77 = sphi 0, %s77
      %s79 = sphi 0, %s77
      %s80 = sphi 0, %s79
      %s94 = sphi 0, %s80
      %s98 = sphi 0, %s98
      %s100 = sphi 0, %s98
      %s101 = sphi 0, %s100
      %s115 = sphi 0, %s101
      %s119 = sphi 0, %s119
      %s121 = sphi 0, %s119
      %s122 = sphi 0, %s121
      %s136 = sphi 0, %s122
      %s140 = sphi 0, %s140
      %s142 = sphi 0, %s140
      %s143 = sphi 0, %s142
      %s157 = sphi 0, %s143
      %s161 = sphi 0, %s161
      %s163 = sphi 0, %s161
      %s164 = sphi 0, %s163
      %s178 = sphi 0, %s164
      %s184 = sphi 0, %s186
      %s187 = sphi 0, %s184
      %s188 = sphi 0, %s187
      %s204 = sphi 0, %s188
    $region4: #{tpu_custom_call.1} parent=1 // loop_header_branch
      %25 = sbr.rel (%p23) target = $region8
    $region5: #{tpu_custom_call.1} parent=1 // loop_body
      %s27 = ssub.s32 %s22, 1
      %s28 = ssub.s32 %s22, 2
      %s29 = sadd.s32 %s22, 1
      %s30 = ssub.s32 %s22, %s29
      %p31 = scmp.eq.s32.totalorder %s30, 0
      %s33 = sadd.s32 %s32, 1
      %s34 = scalar_select %p31, %s32, %s33
      %p37 = pneg %p31
      %p38 = scmp.eq.s32.totalorder %s22, 3
      %p39 = por %p37, %p38
      %p40 = scmp.ne.s32.totalorder %s32, %s35
      %p41 = scmp.eq.s32.totalorder %s22, 0
      %p42 = por %p40, %p41
      %p43 = scmp.ne.s32.totalorder %s32, %s35
      %p44 = scmp.eq.s32.totalorder %s27, 3
      %p45 = por %p43, %p44
      %p46 = scmp.ne.s32.totalorder %s35, %s36
      %p47 = scmp.eq.s32.totalorder %s27, 0
      %p48 = por %p46, %p47
      %p49 = scmp.ne.s32.totalorder %s35, %s36
      %p50 = scmp.eq.s32.totalorder %s28, 3
      %p51 = por %p49, %p50
      %p53 = scmp.ne.s32.totalorder %s36, %s52
      %p54 = scmp.eq.s32.totalorder %s28, 0
      %p55 = por %p53, %p54
      %s57 = sadd.s32 %s56, 1
      %p60 = scmp.eq.s32.totalorder %s22, 3
      %p61 = scmp.ne.s32.totalorder %s56, %s58
      %p62 = scmp.eq.s32.totalorder %s22, 0
      %p63 = por %p61, %p62
      %p64 = scmp.ne.s32.totalorder %s56, %s58
      %p65 = scmp.eq.s32.totalorder %s27, 3
      %p66 = por %p64, %p65
      %p67 = scmp.ne.s32.totalorder %s58, %s59
      %p68 = scmp.eq.s32.totalorder %s27, 0
      %p69 = por %p67, %p68
      %p70 = scmp.ne.s32.totalorder %s58, %s59
      %p71 = scmp.eq.s32.totalorder %s28, 3
      %p72 = por %p70, %p71
      %p74 = scmp.ne.s32.totalorder %s59, %s73
      %p75 = scmp.eq.s32.totalorder %s28, 0
      %p76 = por %p74, %p75
      %s78 = sadd.s32 %s77, 1
      %p81 = scmp.eq.s32.totalorder %s22, 3
      %p82 = scmp.ne.s32.totalorder %s77, %s79
      %p83 = scmp.eq.s32.totalorder %s22, 0
      %p84 = por %p82, %p83
      %p85 = scmp.ne.s32.totalorder %s77, %s79
      %p86 = scmp.eq.s32.totalorder %s27, 3
      %p87 = por %p85, %p86
      %p88 = scmp.ne.s32.totalorder %s79, %s80
      %p89 = scmp.eq.s32.totalorder %s27, 0
      %p90 = por %p88, %p89
      %p91 = scmp.ne.s32.totalorder %s79, %s80
      %p92 = scmp.eq.s32.totalorder %s28, 3
      %p93 = por %p91, %p92
      %p95 = scmp.ne.s32.totalorder %s80, %s94
      %p96 = scmp.eq.s32.totalorder %s28, 0
      %p97 = por %p95, %p96
      %s99 = sadd.s32 %s98, 1
      %p102 = scmp.eq.s32.totalorder %s22, 3
      %p103 = scmp.ne.s32.totalorder %s98, %s100
      %p104 = scmp.eq.s32.totalorder %s22, 0
      %p105 = por %p103, %p104
      %p106 = scmp.ne.s32.totalorder %s98, %s100
      %p107 = scmp.eq.s32.totalorder %s27, 3
      %p108 = por %p106, %p107
      %p109 = scmp.ne.s32.totalorder %s100, %s101
      %p110 = scmp.eq.s32.totalorder %s27, 0
      %p111 = por %p109, %p110
      %p112 = scmp.ne.s32.totalorder %s100, %s101
      %p113 = scmp.eq.s32.totalorder %s28, 3
      %p114 = por %p112, %p113
      %p116 = scmp.ne.s32.totalorder %s101, %s115
      %p117 = scmp.eq.s32.totalorder %s28, 0
      %p118 = por %p116, %p117
      %s120 = sadd.s32 %s119, 1
      %p123 = scmp.eq.s32.totalorder %s22, 3
      %p124 = scmp.ne.s32.totalorder %s119, %s121
      %p125 = scmp.eq.s32.totalorder %s22, 0
      %p126 = por %p124, %p125
      %p127 = scmp.ne.s32.totalorder %s119, %s121
      %p128 = scmp.eq.s32.totalorder %s27, 3
      %p129 = por %p127, %p128
      %p130 = scmp.ne.s32.totalorder %s121, %s122
      %p131 = scmp.eq.s32.totalorder %s27, 0
      %p132 = por %p130, %p131
      %p133 = scmp.ne.s32.totalorder %s121, %s122
      %p134 = scmp.eq.s32.totalorder %s28, 3
      %p135 = por %p133, %p134
      %p137 = scmp.ne.s32.totalorder %s122, %s136
      %p138 = scmp.eq.s32.totalorder %s28, 0
      %p139 = por %p137, %p138
      %s141 = sadd.s32 %s140, 1
      %p144 = scmp.eq.s32.totalorder %s22, 3
      %p145 = scmp.ne.s32.totalorder %s140, %s142
      %p146 = scmp.eq.s32.totalorder %s22, 0
      %p147 = por %p145, %p146
      %p148 = scmp.ne.s32.totalorder %s140, %s142
      %p149 = scmp.eq.s32.totalorder %s27, 3
      %p150 = por %p148, %p149
      %p151 = scmp.ne.s32.totalorder %s142, %s143
      %p152 = scmp.eq.s32.totalorder %s27, 0
      %p153 = por %p151, %p152
      %p154 = scmp.ne.s32.totalorder %s142, %s143
      %p155 = scmp.eq.s32.totalorder %s28, 3
      %p156 = por %p154, %p155
      %p158 = scmp.ne.s32.totalorder %s143, %s157
      %p159 = scmp.eq.s32.totalorder %s28, 0
      %p160 = por %p158, %p159
      %s162 = sadd.s32 %s161, 1
      %p165 = scmp.eq.s32.totalorder %s22, 3
      %p166 = scmp.ne.s32.totalorder %s161, %s163
      %p167 = scmp.eq.s32.totalorder %s22, 0
      %p168 = por %p166, %p167
      %p169 = scmp.ne.s32.totalorder %s161, %s163
      %p170 = scmp.eq.s32.totalorder %s27, 3
      %p171 = por %p169, %p170
      %p172 = scmp.ne.s32.totalorder %s163, %s164
      %p173 = scmp.eq.s32.totalorder %s27, 0
      %p174 = por %p172, %p173
      %p175 = scmp.ne.s32.totalorder %s163, %s164
      %p176 = scmp.eq.s32.totalorder %s28, 3
      %p177 = por %p175, %p176
      %p179 = scmp.ne.s32.totalorder %s164, %s178
      %p180 = scmp.eq.s32.totalorder %s28, 0
      %p181 = por %p179, %p180
      %s182 = ssub.s32 %s22, %s29
      %p183 = scmp.eq.s32.totalorder %s182, 0
      %s185 = sadd.s32 %s184, 1
      %s186 = scalar_select %p183, %s184, %s185
      %p189 = pneg %p183
      %p190 = scmp.eq.s32.totalorder %s22, 3
      %p191 = por %p189, %p190
      %p192 = scmp.ne.s32.totalorder %s184, %s187
      %p193 = scmp.eq.s32.totalorder %s22, 0
      %p194 = por %p192, %p193
      %p195 = scmp.ne.s32.totalorder %s184, %s187
      %p196 = scmp.eq.s32.totalorder %s27, 3
      %p197 = por %p195, %p196
      %p198 = scmp.ne.s32.totalorder %s187, %s188
      %p199 = scmp.eq.s32.totalorder %s27, 0
      %p200 = por %p198, %p199
      %p201 = scmp.ne.s32.totalorder %s187, %s188
      %p202 = scmp.eq.s32.totalorder %s28, 3
      %p203 = por %p201, %p202
      %p205 = scmp.ne.s32.totalorder %s188, %s204
      %p206 = scmp.eq.s32.totalorder %s28, 0
      %p207 = por %p205, %p206
      %p208 = scmp.le.s32.totalorder 1, %s22
      %p209 = scmp.lt.s32.totalorder %s22, 5
      %p210 = pnand %p208, %p209
      %p211 = pneg %p210
      // Predicated region
      $region9: #{tpu_custom_call.1} parent=5 // pred_check
        _
      $region10: #{tpu_custom_call.1} parent=5 // pred_check_branch
        %213 = sbr.rel (%p210) target = $region12
      $region11: #{tpu_custom_call.1} parent=5 // pred_region
        %s214 = ssub.s32 %s22, 1
        // Predicated region
        $region13: #{tpu_custom_call.1} parent=11 // pred_check
          %p215 = pneg %p69
        $region14: #{tpu_custom_call.1} parent=11 // pred_check_branch
          %217 = sbr.rel (%p215) target = $region16
        $region15: #{tpu_custom_call.1} parent=11 // pred_region
          %219 = vsyncadd [#allocation6], 0
          %s220 = sshll.u32 %s1, 4
          %s221 = int_to_ptr.hbm [resolvable:$true] %s220
          %s222 = sshll.u32 [#allocation5], 4
          %s223 = int_to_ptr.vmem [resolvable:$true] %s222
          %228 = dma.hbm_to_vmem [thread:$0]  %s221, 6272, %s223, [#allocation6], 64, 64, 4
        $region16: #{tpu_custom_call.1} parent=11 // pred_fallthru
          _
        // Predicated region
        $region17: #{tpu_custom_call.1} parent=11 // pred_check
          %p229 = pneg %p90
        $region18: #{tpu_custom_call.1} parent=11 // pred_check_branch
          %231 = sbr.rel (%p229) target = $region20
        $region19: #{tpu_custom_call.1} parent=11 // pred_region
          %233 = vsyncadd [#allocation6], 0
          %s235 = sshll.u32 %s2, 4
          %s236 = int_to_ptr.hbm [resolvable:$true] %s235
          %s237 = sshll.u32 [#allocation7], 4
          %s238 = int_to_ptr.vmem [resolvable:$true] %s237
          %240 = dma.hbm_to_vmem [thread:$0]  %s236, 16, %s238, [#allocation6]
        $region20: #{tpu_custom_call.1} parent=11 // pred_fallthru
          _
        // Predicated region
        $region21: #{tpu_custom_call.1} parent=11 // pred_check
          %p241 = pneg %p111
        $region22: #{tpu_custom_call.1} parent=11 // pred_check_branch
          %243 = sbr.rel (%p241) target = $region24
        $region23: #{tpu_custom_call.1} parent=11 // pred_region
          %245 = vsyncadd [#allocation9], 0
          %s246 = sshll.u32 %s3, 4
          %s247 = int_to_ptr.hbm [resolvable:$true] %s246
          %s248 = sshll.u32 [#allocation8], 4
          %s249 = int_to_ptr.vmem [resolvable:$true] %s248
          %254 = dma.hbm_to_vmem [thread:$0]  %s247, 2048, %s249, [#allocation9], 64, 64, 4
        $region24: #{tpu_custom_call.1} parent=11 // pred_fallthru
          _
        // Predicated region
        $region25: #{tpu_custom_call.1} parent=11 // pred_check
          %p255 = pneg %p132
        $region26: #{tpu_custom_call.1} parent=11 // pred_check_branch
          %257 = sbr.rel (%p255) target = $region28
        $region27: #{tpu_custom_call.1} parent=11 // pred_region
          %259 = vsyncadd [#allocation9], 0
          %s260 = sshll.u32 %s4, 4
          %s261 = int_to_ptr.hbm [resolvable:$true] %s260
          %s262 = sshll.u32 [#allocation10], 4
          %s263 = int_to_ptr.vmem [resolvable:$true] %s262
          %268 = dma.hbm_to_vmem [thread:$0]  %s261, 32, %s263, [#allocation9], 16, 16, 1
        $region28: #{tpu_custom_call.1} parent=11 // pred_fallthru
          _
        // Predicated region
        $region29: #{tpu_custom_call.1} parent=11 // pred_check
          %p269 = pneg %p153
        $region30: #{tpu_custom_call.1} parent=11 // pred_check_branch
          %271 = sbr.rel (%p269) target = $region32
        $region31: #{tpu_custom_call.1} parent=11 // pred_region
          %273 = vsyncadd [#allocation12], 0
          %s274 = sshll.u32 %s5, 4
          %s275 = int_to_ptr.hbm [resolvable:$true] %s274
          %s276 = sshll.u32 [#allocation11], 4
          %s277 = int_to_ptr.vmem [resolvable:$true] %s276
          %282 = dma.hbm_to_vmem [thread:$0]  %s275, 1024, %s277, [#allocation12], 64, 64, 4
        $region32: #{tpu_custom_call.1} parent=11 // pred_fallthru
          _
        // Predicated region
        $region33: #{tpu_custom_call.1} parent=11 // pred_check
          %p283 = pneg %p174
        $region34: #{tpu_custom_call.1} parent=11 // pred_check_branch
          %285 = sbr.rel (%p283) target = $region36
        $region35: #{tpu_custom_call.1} parent=11 // pred_region
          %287 = vsyncadd [#allocation12], 0
          %s289 = sshll.u32 %s6, 4
          %s290 = int_to_ptr.hbm [resolvable:$true] %s289
          %s291 = sshll.u32 [#allocation13], 4
          %s292 = int_to_ptr.vmem [resolvable:$true] %s291
          %294 = dma.hbm_to_vmem [thread:$0]  %s290, 16, %s292, [#allocation12]
        $region36: #{tpu_custom_call.1} parent=11 // pred_fallthru
          _
      $region12: #{tpu_custom_call.1} parent=5 // pred_fallthru
        _
      %p295 = scmp.lt.s32.totalorder %s22, 4
      // Predicated region
      $region37: #{tpu_custom_call.1} parent=5 // pred_check
        %p296 = pneg %p295
      $region38: #{tpu_custom_call.1} parent=5 // pred_check_branch
        %298 = sbr.rel (%p296) target = $region40
      $region39: #{tpu_custom_call.1} parent=5 // pred_region
        // Predicated region
        $region41: #{tpu_custom_call.1} parent=39 // pred_check
          %p299 = pneg %p42
        $region42: #{tpu_custom_call.1} parent=39 // pred_check_branch
          %301 = sbr.rel (%p299) target = $region44
        $region43: #{tpu_custom_call.1} parent=39 // pred_region
          %s302 = sand.u32 %s32, 1
          %s303 = scalar_lea.sflag [#allocation3], %s302
          %s304 = sand.u32 %s32, 1
          %s305 = smul.addr %s304, 560
          %s306 = scalar_lea.vmem [#allocation2], %s305
          %s307 = smul.u32 10, %s22
          %309 = vsyncadd %s303, 0
          %s310 = smul.addr %s307, 7
          %s311 = smul.addr %s310, 8
          %s312 = scalar_lea.hbm %s0, %s311
          %s313 = sshll.u32 %s312, 4
          %s314 = int_to_ptr.hbm [resolvable:$true] %s313
          %s315 = sshll.u32 %s306, 4
          %s316 = int_to_ptr.vmem [resolvable:$true] %s315
          %321 = dma.hbm_to_vmem [thread:$0]  %s314, 8960, %s316, %s303, 896, 896, 56
        $region44: #{tpu_custom_call.1} parent=39 // pred_fallthru
          _
      $region40: #{tpu_custom_call.1} parent=5 // pred_fallthru
        _
      %p322 = scmp.le.s32.totalorder 1, %s22
      %p323 = scmp.lt.s32.totalorder %s22, 5
      %p324 = pnand %p322, %p323
      %p325 = pneg %p324
      // Predicated region
      $region45: #{tpu_custom_call.1} parent=5 // pred_check
        _
      $region46: #{tpu_custom_call.1} parent=5 // pred_check_branch
        %327 = sbr.rel (%p324) target = $region48
      $region47: #{tpu_custom_call.1} parent=5 // pred_region
        %s328 = ssub.s32 %s22, 1
        %s329 = sand.u32 %s35, 1
        %s330 = scalar_lea.sflag [#allocation3], %s329
        %s331 = sand.u32 %s35, 1
        %s332 = smul.addr %s331, 560
        %s333 = scalar_lea.vmem [#allocation2], %s332
        // Predicated region
        $region49: #{tpu_custom_call.1} parent=47 // pred_check
          %p334 = pneg %p48
        $region50: #{tpu_custom_call.1} parent=47 // pred_check_branch
          %336 = sbr.rel (%p334) target = $region52
        $region51: #{tpu_custom_call.1} parent=47 // pred_region
          %338 = dma.done %s330, 8960
        $region52: #{tpu_custom_call.1} parent=47 // pred_fallthru
          _
        // Predicated region
        $region53: #{tpu_custom_call.1} parent=47 // pred_check
          %p339 = pneg %p69
        $region54: #{tpu_custom_call.1} parent=47 // pred_check_branch
          %341 = sbr.rel (%p339) target = $region56
        $region55: #{tpu_custom_call.1} parent=47 // pred_region
          %343 = dma.done [#allocation6], 6272
        $region56: #{tpu_custom_call.1} parent=47 // pred_fallthru
          _
        // Predicated region
        $region57: #{tpu_custom_call.1} parent=47 // pred_check
          %p344 = pneg %p90
        $region58: #{tpu_custom_call.1} parent=47 // pred_check_branch
          %346 = sbr.rel (%p344) target = $region60
        $region59: #{tpu_custom_call.1} parent=47 // pred_region
          %348 = dma.done [#allocation6], 16
        $region60: #{tpu_custom_call.1} parent=47 // pred_fallthru
          _
        // Predicated region
        $region61: #{tpu_custom_call.1} parent=47 // pred_check
          %p349 = pneg %p111
        $region62: #{tpu_custom_call.1} parent=47 // pred_check_branch
          %351 = sbr.rel (%p349) target = $region64
        $region63: #{tpu_custom_call.1} parent=47 // pred_region
          %353 = dma.done [#allocation9], 2048
        $region64: #{tpu_custom_call.1} parent=47 // pred_fallthru
          _
        // Predicated region
        $region65: #{tpu_custom_call.1} parent=47 // pred_check
          %p354 = pneg %p132
        $region66: #{tpu_custom_call.1} parent=47 // pred_check_branch
          %356 = sbr.rel (%p354) target = $region68
        $region67: #{tpu_custom_call.1} parent=47 // pred_region
          %358 = dma.done [#allocation9], 32
        $region68: #{tpu_custom_call.1} parent=47 // pred_fallthru
          _
        // Predicated region
        $region69: #{tpu_custom_call.1} parent=47 // pred_check
          %p359 = pneg %p153
        $region70: #{tpu_custom_call.1} parent=47 // pred_check_branch
          %361 = sbr.rel (%p359) target = $region72
        $region71: #{tpu_custom_call.1} parent=47 // pred_region
          %363 = dma.done [#allocation12], 1024
        $region72: #{tpu_custom_call.1} parent=47 // pred_fallthru
          _
        // Predicated region
        $region73: #{tpu_custom_call.1} parent=47 // pred_check
          %p364 = pneg %p174
        $region74: #{tpu_custom_call.1} parent=47 // pred_check_branch
          %366 = sbr.rel (%p364) target = $region76
        $region75: #{tpu_custom_call.1} parent=47 // pred_region
          %368 = dma.done [#allocation12], 16
        $region76: #{tpu_custom_call.1} parent=47 // pred_fallthru
          _
        %s369 = sand.u32 %s35, 1
        %s370 = scalar_lea.sflag [#allocation3], %s369
        %s371 = sand.u32 %s35, 1
        %s372 = smul.addr %s371, 560
        %s373 = scalar_lea.vmem [#allocation2], %s372
        %p374 = pneg %p48
        %p375 = pneg %p45
        %p376 = pneg %p69
        %p377 = pneg %p66
        %p378 = pneg %p90
        %p379 = pneg %p87
        %p380 = pneg %p111
        %p381 = pneg %p108
        %p382 = pneg %p132
        %p383 = pneg %p129
        %p384 = pneg %p153
        %p385 = pneg %p150
        %p386 = pneg %p174
        %p387 = pneg %p171
        %p388 = pneg %p200
        %p389 = pneg %p197
        %s390 = sand.u32 %s187, 1
        %s391 = scalar_lea.sflag [#allocation4], %s390
        %s392 = sand.u32 %s187, 1
        %s393 = smul.addr %s392, 40
        %s394 = scalar_lea.vmem [#allocation14], %s393
        %s395 = smul.u32 10, %s27
        %s396 = smul.u32 10, %s27
        %v398 = vld [vmem:[%s333] sm:$0xff]
        %v399 = vld [vmem:[%s333 + $0x8] sm:$0xff]
        %v400 = vld [vmem:[%s333 + $0x10] sm:$0xff]
        %v401 = vld [vmem:[%s333 + $0x18] sm:$0xff]
        %v402 = vld [vmem:[%s333 + $0x20] sm:$0xff]
        %v403 = vld [vmem:[%s333 + $0x28] sm:$0xff]
        %v404 = vld [vmem:[%s333 + $0x30] sm:$0xff]
        %v405 = vld [vmem:[%s333 + $0x38] sm:$0xff]
        %v406 = vld [vmem:[%s333 + $0x40] sm:$0xff]
        %v407 = vld [vmem:[%s333 + $0x48] sm:$0xff]
        %v408 = vld [vmem:[%s333 + $0x50] sm:$0xff]
        %v409 = vld [vmem:[%s333 + $0x58] sm:$0xff]
        %v410 = vld [vmem:[%s333 + $0x60] sm:$0xff]
        %v411 = vld [vmem:[%s333 + $0x68] sm:$0xff]
        %v412 = vld [vmem:[%s333 + $0x70] sm:$0xff]
        %v413 = vld [vmem:[%s333 + $0x78] sm:$0xff]
        %v414 = vld [vmem:[%s333 + $0x80] sm:$0xff]
        %v415 = vld [vmem:[%s333 + $0x88] sm:$0xff]
        %v416 = vld [vmem:[%s333 + $0x90] sm:$0xff]
        %v417 = vld [vmem:[%s333 + $0x98] sm:$0xff]
        %v418 = vld [vmem:[%s333 + $0xa0] sm:$0xff]
        %v419 = vld [vmem:[%s333 + $0xa8] sm:$0xff]
        %v420 = vld [vmem:[%s333 + $0xb0] sm:$0xff]
        %v421 = vld [vmem:[%s333 + $0xb8] sm:$0xff]
        %v422 = vld [vmem:[%s333 + $0xc0] sm:$0xff]
        %v423 = vld [vmem:[%s333 + $0xc8] sm:$0xff]
        %v424 = vld [vmem:[%s333 + $0xd0] sm:$0xff]
        %v425 = vld [vmem:[%s333 + $0xd8] sm:$0xff]
        %v426 = vld [vmem:[%s333 + $0xe0] sm:$0xff]
        %v427 = vld [vmem:[%s333 + $0xe8] sm:$0xff]
        %v428 = vld [vmem:[%s333 + $0xf0] sm:$0xff]
        %v429 = vld [vmem:[%s333 + $0xf8] sm:$0xff]
        %v430 = vld [vmem:[%s333 + $0x100] sm:$0xff]
        %v431 = vld [vmem:[%s333 + $0x108] sm:$0xff]
        %v432 = vld [vmem:[%s333 + $0x110] sm:$0xff]
        %v433 = vld [vmem:[%s333 + $0x118] sm:$0xff]
        %v434 = vld [vmem:[%s333 + $0x120] sm:$0xff]
        %v435 = vld [vmem:[%s333 + $0x128] sm:$0xff]
        %v436 = vld [vmem:[%s333 + $0x130] sm:$0xff]
        %v437 = vld [vmem:[%s333 + $0x138] sm:$0xff]
        %v438 = vld [vmem:[%s333 + $0x140] sm:$0xff]
        %v439 = vld [vmem:[%s333 + $0x148] sm:$0xff]
        %v440 = vld [vmem:[%s333 + $0x150] sm:$0xff]
        %v441 = vld [vmem:[%s333 + $0x158] sm:$0xff]
        %v442 = vld [vmem:[%s333 + $0x160] sm:$0xff]
        %v443 = vld [vmem:[%s333 + $0x168] sm:$0xff]
        %v444 = vld [vmem:[%s333 + $0x170] sm:$0xff]
        %v445 = vld [vmem:[%s333 + $0x178] sm:$0xff]
        %v446 = vld [vmem:[%s333 + $0x180] sm:$0xff]
        %v447 = vld [vmem:[%s333 + $0x188] sm:$0xff]
        %v448 = vld [vmem:[%s333 + $0x190] sm:$0xff]
        %v449 = vld [vmem:[%s333 + $0x198] sm:$0xff]
        %v450 = vld [vmem:[%s333 + $0x1a0] sm:$0xff]
        %v451 = vld [vmem:[%s333 + $0x1a8] sm:$0xff]
        %v452 = vld [vmem:[%s333 + $0x1b0] sm:$0xff]
        %v453 = vld [vmem:[%s333 + $0x1b8] sm:$0xff]
        %v454 = vld [vmem:[%s333 + $0x1c0] sm:$0xff]
        %v455 = vld [vmem:[%s333 + $0x1c8] sm:$0xff]
        %v456 = vld [vmem:[%s333 + $0x1d0] sm:$0xff]
        %v457 = vld [vmem:[%s333 + $0x1d8] sm:$0xff]
        %v458 = vld [vmem:[%s333 + $0x1e0] sm:$0xff]
        %v459 = vld [vmem:[%s333 + $0x1e8] sm:$0xff]
        %v460 = vld [vmem:[%s333 + $0x1f0] sm:$0xff]
        %v461 = vld [vmem:[%s333 + $0x1f8] sm:$0xff]
        %v462 = vld [vmem:[%s333 + $0x200] sm:$0xff]
        %v463 = vld [vmem:[%s333 + $0x208] sm:$0xff]
        %v464 = vld [vmem:[%s333 + $0x210] sm:$0xff]
        %v465 = vld [vmem:[%s333 + $0x218] sm:$0xff]
        %v466 = vld [vmem:[%s333 + $0x220] sm:$0xff]
        %v467 = vld [vmem:[%s333 + $0x228] sm:$0xff]
        %v468 = vpack.c.bf16 %v405, %v398
        %v469 = vpack.c.bf16 %v406, %v399
        %v470 = vpack.c.bf16 %v407, %v400
        %v471 = vpack.c.bf16 %v408, %v401
        %v472 = vpack.c.bf16 %v409, %v402
        %v473 = vpack.c.bf16 %v410, %v403
        %v474 = vpack.c.bf16 %v411, %v404
        %v475 = vpack.c.bf16 %v419, %v412
        %v476 = vpack.c.bf16 %v420, %v413
        %v477 = vpack.c.bf16 %v421, %v414
        %v478 = vpack.c.bf16 %v422, %v415
        %v479 = vpack.c.bf16 %v423, %v416
        %v480 = vpack.c.bf16 %v424, %v417
        %v481 = vpack.c.bf16 %v425, %v418
        %v482 = vpack.c.bf16 %v433, %v426
        %v483 = vpack.c.bf16 %v434, %v427
        %v484 = vpack.c.bf16 %v435, %v428
        %v485 = vpack.c.bf16 %v436, %v429
        %v486 = vpack.c.bf16 %v437, %v430
        %v487 = vpack.c.bf16 %v438, %v431
        %v488 = vpack.c.bf16 %v439, %v432
        %v489 = vpack.c.bf16 %v447, %v440
        %v490 = vpack.c.bf16 %v448, %v441
        %v491 = vpack.c.bf16 %v449, %v442
        %v492 = vpack.c.bf16 %v450, %v443
        %v493 = vpack.c.bf16 %v451, %v444
        %v494 = vpack.c.bf16 %v452, %v445
        %v495 = vpack.c.bf16 %v453, %v446
        %v496 = vpack.c.bf16 %v461, %v454
        %v497 = vpack.c.bf16 %v462, %v455
        %v498 = vpack.c.bf16 %v463, %v456
        %v499 = vpack.c.bf16 %v464, %v457
        %v500 = vpack.c.bf16 %v465, %v458
        %v501 = vpack.c.bf16 %v466, %v459
        %v502 = vpack.c.bf16 %v467, %v460
        %v503 = vld [vmem:[#allocation5] sm:$0xf]
        %v504 = vld [vmem:[#allocation5 + $0x4] sm:$0xf]
        %v505 = vld [vmem:[#allocation5 + $0x8] sm:$0xf]
        %v506 = vld [vmem:[#allocation5 + $0xc] sm:$0xf]
        %v507 = vld [vmem:[#allocation5 + $0x10] sm:$0xf]
        %v508 = vld [vmem:[#allocation5 + $0x14] sm:$0xf]
        %v509 = vld [vmem:[#allocation5 + $0x18] sm:$0xf]
        %v510 = vld [vmem:[#allocation5 + $0x1c] sm:$0xf]
        %v511 = vld [vmem:[#allocation5 + $0x20] sm:$0xf]
        %v512 = vld [vmem:[#allocation5 + $0x24] sm:$0xf]
        %v513 = vld [vmem:[#allocation5 + $0x28] sm:$0xf]
        %v514 = vld [vmem:[#allocation5 + $0x2c] sm:$0xf]
        %v515 = vld [vmem:[#allocation5 + $0x30] sm:$0xf]
        %v516 = vld [vmem:[#allocation5 + $0x34] sm:$0xf]
        %v517 = vld [vmem:[#allocation5 + $0x38] sm:$0xf]
        %v518 = vld [vmem:[#allocation5 + $0x3c] sm:$0xf]
        %v519 = vld [vmem:[#allocation5 + $0x40] sm:$0xf]
        %v520 = vld [vmem:[#allocation5 + $0x44] sm:$0xf]
        %v521 = vld [vmem:[#allocation5 + $0x48] sm:$0xf]
        %v522 = vld [vmem:[#allocation5 + $0x4c] sm:$0xf]
        %v523 = vld [vmem:[#allocation5 + $0x50] sm:$0xf]
        %v524 = vld [vmem:[#allocation5 + $0x54] sm:$0xf]
        %v525 = vld [vmem:[#allocation5 + $0x58] sm:$0xf]
        %v526 = vld [vmem:[#allocation5 + $0x5c] sm:$0xf]
        %v527 = vld [vmem:[#allocation5 + $0x60] sm:$0xf]
        %v528 = vld [vmem:[#allocation5 + $0x64] sm:$0xf]
        %v529 = vld [vmem:[#allocation5 + $0x68] sm:$0xf]
        %v530 = vld [vmem:[#allocation5 + $0x6c] sm:$0xf]
        %v531 = vld [vmem:[#allocation5 + $0x70] sm:$0xf]
        %v532 = vld [vmem:[#allocation5 + $0x74] sm:$0xf]
        %v533 = vld [vmem:[#allocation5 + $0x78] sm:$0xf]
        %v534 = vld [vmem:[#allocation5 + $0x7c] sm:$0xf]
        %v535 = vld [vmem:[#allocation5 + $0x80] sm:$0xf]
        %v536 = vld [vmem:[#allocation5 + $0x84] sm:$0xf]
        %v537 = vld [vmem:[#allocation5 + $0x88] sm:$0xf]
        %v538 = vld [vmem:[#allocation5 + $0x8c] sm:$0xf]
        %v539 = vld [vmem:[#allocation5 + $0x90] sm:$0xf]
        %v540 = vld [vmem:[#allocation5 + $0x94] sm:$0xf]
        %v541 = vld [vmem:[#allocation5 + $0x98] sm:$0xf]
        %v542 = vld [vmem:[#allocation5 + $0x9c] sm:$0xf]
        %v543 = vld [vmem:[#allocation5 + $0xa0] sm:$0xf]
        %v544 = vld [vmem:[#allocation5 + $0xa4] sm:$0xf]
        %v545 = vld [vmem:[#allocation5 + $0xa8] sm:$0xf]
        %v546 = vld [vmem:[#allocation5 + $0xac] sm:$0xf]
        %v547 = vld [vmem:[#allocation5 + $0xb0] sm:$0xf]
        %v548 = vld [vmem:[#allocation5 + $0xb4] sm:$0xf]
        %v549 = vld [vmem:[#allocation5 + $0xb8] sm:$0xf]
        %v550 = vld [vmem:[#allocation5 + $0xbc] sm:$0xf]
        %v551 = vld [vmem:[#allocation5 + $0xc0] sm:$0xf]
        %v552 = vld [vmem:[#allocation5 + $0xc4] sm:$0xf]
        %v553 = vld [vmem:[#allocation5 + $0xc8] sm:$0xf]
        %v554 = vld [vmem:[#allocation5 + $0xcc] sm:$0xf]
        %v555 = vld [vmem:[#allocation5 + $0xd0] sm:$0xf]
        %v556 = vld [vmem:[#allocation5 + $0xd4] sm:$0xf]
        %v557 = vld [vmem:[#allocation5 + $0xd8] sm:$0xf]
        %v558 = vld [vmem:[#allocation5 + $0xdc] sm:$0xf]
        %v559 = vld [vmem:[#allocation5 + $0xe0] sm:$0xf]
        %v560 = vld [vmem:[#allocation5 + $0xe4] sm:$0xf]
        %v561 = vld [vmem:[#allocation5 + $0xe8] sm:$0xf]
        %v562 = vld [vmem:[#allocation5 + $0xec] sm:$0xf]
        %v563 = vld [vmem:[#allocation5 + $0xf0] sm:$0xf]
        %v564 = vld [vmem:[#allocation5 + $0xf4] sm:$0xf]
        %v565 = vld [vmem:[#allocation5 + $0xf8] sm:$0xf]
        %v566 = vld [vmem:[#allocation5 + $0xfc] sm:$0xf]
        %v567 = vld [vmem:[#allocation5 + $0x100] sm:$0xf]
        %v568 = vld [vmem:[#allocation5 + $0x104] sm:$0xf]
        %v569 = vld [vmem:[#allocation5 + $0x108] sm:$0xf]
        %v570 = vld [vmem:[#allocation5 + $0x10c] sm:$0xf]
        %v571 = vld [vmem:[#allocation5 + $0x110] sm:$0xf]
        %v572 = vld [vmem:[#allocation5 + $0x114] sm:$0xf]
        %v573 = vld [vmem:[#allocation5 + $0x118] sm:$0xf]
        %v574 = vld [vmem:[#allocation5 + $0x11c] sm:$0xf]
        %v575 = vld [vmem:[#allocation5 + $0x120] sm:$0xf]
        %v576 = vld [vmem:[#allocation5 + $0x124] sm:$0xf]
        %v577 = vld [vmem:[#allocation5 + $0x128] sm:$0xf]
        %v578 = vld [vmem:[#allocation5 + $0x12c] sm:$0xf]
        %v579 = vld [vmem:[#allocation5 + $0x130] sm:$0xf]
        %v580 = vld [vmem:[#allocation5 + $0x134] sm:$0xf]
        %v581 = vld [vmem:[#allocation5 + $0x138] sm:$0xf]
        %v582 = vld [vmem:[#allocation5 + $0x13c] sm:$0xf]
        %v583 = vld [vmem:[#allocation5 + $0x140] sm:$0xf]
        %v584 = vld [vmem:[#allocation5 + $0x144] sm:$0xf]
        %v585 = vld [vmem:[#allocation5 + $0x148] sm:$0xf]
        %v586 = vld [vmem:[#allocation5 + $0x14c] sm:$0xf]
        %v587 = vld [vmem:[#allocation5 + $0x150] sm:$0xf]
        %v588 = vld [vmem:[#allocation5 + $0x154] sm:$0xf]
        %v589 = vld [vmem:[#allocation5 + $0x158] sm:$0xf]
        %v590 = vld [vmem:[#allocation5 + $0x15c] sm:$0xf]
        %v591 = vld [vmem:[#allocation5 + $0x160] sm:$0xf]
        %v592 = vld [vmem:[#allocation5 + $0x164] sm:$0xf]
        %v593 = vld [vmem:[#allocation5 + $0x168] sm:$0xf]
        %v594 = vld [vmem:[#allocation5 + $0x16c] sm:$0xf]
        %v595 = vld [vmem:[#allocation5 + $0x170] sm:$0xf]
        %v596 = vld [vmem:[#allocation5 + $0x174] sm:$0xf]
        %v597 = vld [vmem:[#allocation5 + $0x178] sm:$0xf]
        %v598 = vld [vmem:[#allocation5 + $0x17c] sm:$0xf]
        %v599 = vld [vmem:[#allocation5 + $0x180] sm:$0xf]
        %v600 = vld [vmem:[#allocation5 + $0x184] sm:$0xf]
        %v601 = vld [vmem:[#allocation7] sm:$0x1]
        %v603 = vperm.slane %v601, 0
        %v703 = vunpack.c.l.b16 %v503
        %v704 = vunpack.c.l.b16 %v504
        %v705 = vunpack.c.l.b16 %v505
        %v706 = vunpack.c.l.b16 %v506
        %v707 = vunpack.c.l.b16 %v507
        %v708 = vunpack.c.l.b16 %v508
        %v709 = vunpack.c.l.b16 %v509
        %v710 = vunpack.c.l.b16 %v510
        %v711 = vunpack.c.l.b16 %v511
        %v712 = vunpack.c.l.b16 %v512
        %v713 = vunpack.c.l.b16 %v513
        %v714 = vunpack.c.l.b16 %v514
        %v715 = vunpack.c.l.b16 %v515
        %v716 = vunpack.c.l.b16 %v516
        %v717 = vunpack.c.l.b16 %v517
        %v718 = vunpack.c.l.b16 %v518
        %v719 = vunpack.c.l.b16 %v519
        %v720 = vunpack.c.l.b16 %v520
        %v721 = vunpack.c.l.b16 %v521
        %v722 = vunpack.c.l.b16 %v522
        %v723 = vunpack.c.l.b16 %v523
        %v724 = vunpack.c.l.b16 %v524
        %v725 = vunpack.c.l.b16 %v525
        %v726 = vunpack.c.l.b16 %v526
        %v727 = vunpack.c.l.b16 %v527
        %v728 = vunpack.c.l.b16 %v528
        %v729 = vunpack.c.l.b16 %v529
        %v730 = vunpack.c.l.b16 %v530
        %v731 = vunpack.c.l.b16 %v531
        %v732 = vunpack.c.l.b16 %v532
        %v733 = vunpack.c.l.b16 %v533
        %v734 = vunpack.c.l.b16 %v534
        %v735 = vunpack.c.l.b16 %v535
        %v736 = vunpack.c.l.b16 %v536
        %v737 = vunpack.c.l.b16 %v537
        %v738 = vunpack.c.l.b16 %v538
        %v739 = vunpack.c.l.b16 %v539
        %v740 = vunpack.c.l.b16 %v540
        %v741 = vunpack.c.l.b16 %v541
        %v742 = vunpack.c.l.b16 %v542
        %v743 = vunpack.c.l.b16 %v543
        %v744 = vunpack.c.l.b16 %v544
        %v745 = vunpack.c.l.b16 %v545
        %v746 = vunpack.c.l.b16 %v546
        %v747 = vunpack.c.l.b16 %v547
        %v748 = vunpack.c.l.b16 %v548
        %v749 = vunpack.c.l.b16 %v549
        %v750 = vunpack.c.l.b16 %v550
        %v751 = vunpack.c.l.b16 %v551
        %v752 = vunpack.c.l.b16 %v552
        %v753 = vunpack.c.l.b16 %v553
        %v754 = vunpack.c.l.b16 %v554
        %v755 = vunpack.c.l.b16 %v555
        %v756 = vunpack.c.l.b16 %v556
        %v757 = vunpack.c.l.b16 %v557
        %v758 = vunpack.c.l.b16 %v558
        %v759 = vunpack.c.l.b16 %v559
        %v760 = vunpack.c.l.b16 %v560
        %v761 = vunpack.c.l.b16 %v561
        %v762 = vunpack.c.l.b16 %v562
        %v763 = vunpack.c.l.b16 %v563
        %v764 = vunpack.c.l.b16 %v564
        %v765 = vunpack.c.l.b16 %v565
        %v766 = vunpack.c.l.b16 %v566
        %v767 = vunpack.c.l.b16 %v567
        %v768 = vunpack.c.l.b16 %v568
        %v769 = vunpack.c.l.b16 %v569
        %v770 = vunpack.c.l.b16 %v570
        %v771 = vunpack.c.l.b16 %v571
        %v772 = vunpack.c.l.b16 %v572
        %v773 = vunpack.c.l.b16 %v573
        %v774 = vunpack.c.l.b16 %v574
        %v775 = vunpack.c.l.b16 %v575
        %v776 = vunpack.c.l.b16 %v576
        %v777 = vunpack.c.l.b16 %v577
        %v778 = vunpack.c.l.b16 %v578
        %v779 = vunpack.c.l.b16 %v579
        %v780 = vunpack.c.l.b16 %v580
        %v781 = vunpack.c.l.b16 %v581
        %v782 = vunpack.c.l.b16 %v582
        %v783 = vunpack.c.l.b16 %v583
        %v784 = vunpack.c.l.b16 %v584
        %v785 = vunpack.c.l.b16 %v585
        %v786 = vunpack.c.l.b16 %v586
        %v787 = vunpack.c.l.b16 %v587
        %v788 = vunpack.c.l.b16 %v588
        %v789 = vunpack.c.l.b16 %v589
        %v790 = vunpack.c.l.b16 %v590
        %v791 = vunpack.c.l.b16 %v591
        %v792 = vunpack.c.l.b16 %v592
        %v793 = vunpack.c.l.b16 %v593
        %v794 = vunpack.c.l.b16 %v594
        %v795 = vunpack.c.l.b16 %v595
        %v796 = vunpack.c.l.b16 %v596
        %v797 = vunpack.c.l.b16 %v597
        %v798 = vunpack.c.l.b16 %v598
        %v799 = vunpack.c.l.b16 %v599
        %v800 = vunpack.c.l.b16 %v600
        %v801 = vpack.c.b16 %v704, %v703
        %v802 = vpack.c.b16 %v706, %v705
        %v803 = vpack.c.b16 %v708, %v707
        %v804 = vpack.c.b16 %v710, %v709
        %v805 = vpack.c.b16 %v712, %v711
        %v806 = vpack.c.b16 %v714, %v713
        %v807 = vpack.c.b16 %v716, %v715
        %v808 = vpack.c.b16 %v718, %v717
        %v809 = vpack.c.b16 %v720, %v719
        %v810 = vpack.c.b16 %v722, %v721
        %v811 = vpack.c.b16 %v724, %v723
        %v812 = vpack.c.b16 %v726, %v725
        %v813 = vpack.c.b16 %v728, %v727
        %v814 = vpack.c.b16 %v730, %v729
        %v815 = vpack.c.b16 %v732, %v731
        %v816 = vpack.c.b16 %v734, %v733
        %v817 = vpack.c.b16 %v736, %v735
        %v818 = vpack.c.b16 %v738, %v737
        %v819 = vpack.c.b16 %v740, %v739
        %v820 = vpack.c.b16 %v742, %v741
        %v821 = vpack.c.b16 %v744, %v743
        %v822 = vpack.c.b16 %v746, %v745
        %v823 = vpack.c.b16 %v748, %v747
        %v824 = vpack.c.b16 %v750, %v749
        %v825 = vpack.c.b16 %v752, %v751
        %v826 = vpack.c.b16 %v754, %v753
        %v827 = vpack.c.b16 %v756, %v755
        %v828 = vpack.c.b16 %v758, %v757
        %v829 = vpack.c.b16 %v760, %v759
        %v830 = vpack.c.b16 %v762, %v761
        %v831 = vpack.c.b16 %v764, %v763
        %v832 = vpack.c.b16 %v766, %v765
        %v833 = vpack.c.b16 %v768, %v767
        %v834 = vpack.c.b16 %v770, %v769
        %v835 = vpack.c.b16 %v772, %v771
        %v836 = vpack.c.b16 %v774, %v773
        %v837 = vpack.c.b16 %v776, %v775
        %v838 = vpack.c.b16 %v778, %v777
        %v839 = vpack.c.b16 %v780, %v779
        %v840 = vpack.c.b16 %v782, %v781
        %v841 = vpack.c.b16 %v784, %v783
        %v842 = vpack.c.b16 %v786, %v785
        %v843 = vpack.c.b16 %v788, %v787
        %v844 = vpack.c.b16 %v790, %v789
        %v845 = vpack.c.b16 %v792, %v791
        %v846 = vpack.c.b16 %v794, %v793
        %v847 = vpack.c.b16 %v796, %v795
        %v848 = vpack.c.b16 %v798, %v797
        %v849 = vpack.c.b16 %v800, %v799
        %vm899 = vcmask 130048
        %v901 = vsel %vm899, %v474, 0
        %v904 = vsel %vm899, %v481, 0
        %v907 = vsel %vm899, %v488, 0
        %v910 = vsel %vm899, %v495, 0
        %v913 = vsel %vm899, %v502, 0
        %915 = vmatpush.bf16.msra.mxu0 %v808
        %916 = vmatpush.bf16.msra.mxu0 %v807
        %917 = vmatpush.bf16.msra.mxu0 %v806
        %918 = vmatpush.bf16.msra.mxu0 %v805
        %919 = vmatpush.bf16.msra.mxu0 %v804
        %920 = vmatpush.bf16.msra.mxu0 %v803
        %921 = vmatpush.bf16.msra.mxu0 %v802
        %922 = vmatpush.bf16.msra.mxu0 %v801
        %923 = vmatmul.bf16.gmra.mxu0 %v468
        %v924 = vpop.f32.mrf.mxu0
        %v925 = vadd.f32 %v603, %v924
        %v926 = vpop.f32.mrf.mxu0
        %v927 = vadd.f32 %v603, %v926
        %928 = vmatmul.bf16.gmra.mxu0 %v475
        %v929 = vpop.f32.mrf.mxu0
        %v930 = vadd.f32 %v603, %v929
        %v931 = vpop.f32.mrf.mxu0
        %v932 = vadd.f32 %v603, %v931
        %933 = vmatmul.bf16.gmra.mxu0 %v482
        %v934 = vpop.f32.mrf.mxu0
        %v935 = vadd.f32 %v603, %v934
        %v936 = vpop.f32.mrf.mxu0
        %v937 = vadd.f32 %v603, %v936
        %938 = vmatmul.bf16.gmra.mxu0 %v489
        %v939 = vpop.f32.mrf.mxu0
        %v940 = vadd.f32 %v603, %v939
        %v941 = vpop.f32.mrf.mxu0
        %v942 = vadd.f32 %v603, %v941
        %943 = vmatmul.bf16.gmra.mxu0 %v496
        %v944 = vpop.f32.mrf.mxu0
        %v945 = vadd.f32 %v603, %v944
        %v946 = vpop.f32.mrf.mxu0
        %v947 = vadd.f32 %v603, %v946
        %948 = vdwg.mxu0
        %949 = vmatpush.bf16.msra.mxu0 %v816
        %950 = vmatpush.bf16.msra.mxu0 %v815
        %951 = vmatpush.bf16.msra.mxu0 %v814
        %952 = vmatpush.bf16.msra.mxu0 %v813
        %953 = vmatpush.bf16.msra.mxu0 %v812
        %954 = vmatpush.bf16.msra.mxu0 %v811
        %955 = vmatpush.bf16.msra.mxu0 %v810
        %956 = vmatpush.bf16.msra.mxu0 %v809
        %957 = vmatmul.bf16.gmra.mxu0 %v469
        %v958 = vpop.f32.mrf.mxu0
        %v959 = vadd.f32 %v925, %v958
        %v960 = vpop.f32.mrf.mxu0
        %v961 = vadd.f32 %v927, %v960
        %962 = vmatmul.bf16.gmra.mxu0 %v476
        %v963 = vpop.f32.mrf.mxu0
        %v964 = vadd.f32 %v930, %v963
        %v965 = vpop.f32.mrf.mxu0
        %v966 = vadd.f32 %v932, %v965
        %967 = vmatmul.bf16.gmra.mxu0 %v483
        %v968 = vpop.f32.mrf.mxu0
        %v969 = vadd.f32 %v935, %v968
        %v970 = vpop.f32.mrf.mxu0
        %v971 = vadd.f32 %v937, %v970
        %972 = vmatmul.bf16.gmra.mxu0 %v490
        %v973 = vpop.f32.mrf.mxu0
        %v974 = vadd.f32 %v940, %v973
        %v975 = vpop.f32.mrf.mxu0
        %v976 = vadd.f32 %v942, %v975
        %977 = vmatmul.bf16.gmra.mxu0 %v497
        %v978 = vpop.f32.mrf.mxu0
        %v979 = vadd.f32 %v945, %v978
        %v980 = vpop.f32.mrf.mxu0
        %v981 = vadd.f32 %v947, %v980
        %982 = vdwg.mxu0
        %983 = vmatpush.bf16.msra.mxu0 %v824
        %984 = vmatpush.bf16.msra.mxu0 %v823
        %985 = vmatpush.bf16.msra.mxu0 %v822
        %986 = vmatpush.bf16.msra.mxu0 %v821
        %987 = vmatpush.bf16.msra.mxu0 %v820
        %988 = vmatpush.bf16.msra.mxu0 %v819
        %989 = vmatpush.bf16.msra.mxu0 %v818
        %990 = vmatpush.bf16.msra.mxu0 %v817
        %991 = vmatmul.bf16.gmra.mxu0 %v470
        %v992 = vpop.f32.mrf.mxu0
        %v993 = vadd.f32 %v959, %v992
        %v994 = vpop.f32.mrf.mxu0
        %v995 = vadd.f32 %v961, %v994
        %996 = vmatmul.bf16.gmra.mxu0 %v477
        %v997 = vpop.f32.mrf.mxu0
        %v998 = vadd.f32 %v964, %v997
        %v999 = vpop.f32.mrf.mxu0
        %v1000 = vadd.f32 %v966, %v999
        %1001 = vmatmul.bf16.gmra.mxu0 %v484
        %v1002 = vpop.f32.mrf.mxu0
        %v1003 = vadd.f32 %v969, %v1002
        %v1004 = vpop.f32.mrf.mxu0
        %v1005 = vadd.f32 %v971, %v1004
        %1006 = vmatmul.bf16.gmra.mxu0 %v491
        %v1007 = vpop.f32.mrf.mxu0
        %v1008 = vadd.f32 %v974, %v1007
        %v1009 = vpop.f32.mrf.mxu0
        %v1010 = vadd.f32 %v976, %v1009
        %1011 = vmatmul.bf16.gmra.mxu0 %v498
        %v1012 = vpop.f32.mrf.mxu0
        %v1013 = vadd.f32 %v979, %v1012
        %v1014 = vpop.f32.mrf.mxu0
        %v1015 = vadd.f32 %v981, %v1014
        %1016 = vdwg.mxu0
        %1017 = vmatpush.bf16.msra.mxu0 %v832
        %1018 = vmatpush.bf16.msra.mxu0 %v831
        %1019 = vmatpush.bf16.msra.mxu0 %v830
        %1020 = vmatpush.bf16.msra.mxu0 %v829
        %1021 = vmatpush.bf16.msra.mxu0 %v828
        %1022 = vmatpush.bf16.msra.mxu0 %v827
        %1023 = vmatpush.bf16.msra.mxu0 %v826
        %1024 = vmatpush.bf16.msra.mxu0 %v825
        %1025 = vmatmul.bf16.gmra.mxu0 %v471
        %v1026 = vpop.f32.mrf.mxu0
        %v1027 = vadd.f32 %v993, %v1026
        %v1028 = vpop.f32.mrf.mxu0
        %v1029 = vadd.f32 %v995, %v1028
        %1030 = vmatmul.bf16.gmra.mxu0 %v478
        %v1031 = vpop.f32.mrf.mxu0
        %v1032 = vadd.f32 %v998, %v1031
        %v1033 = vpop.f32.mrf.mxu0
        %v1034 = vadd.f32 %v1000, %v1033
        %1035 = vmatmul.bf16.gmra.mxu0 %v485
        %v1036 = vpop.f32.mrf.mxu0
        %v1037 = vadd.f32 %v1003, %v1036
        %v1038 = vpop.f32.mrf.mxu0
        %v1039 = vadd.f32 %v1005, %v1038
        %1040 = vmatmul.bf16.gmra.mxu0 %v492
        %v1041 = vpop.f32.mrf.mxu0
        %v1042 = vadd.f32 %v1008, %v1041
        %v1043 = vpop.f32.mrf.mxu0
        %v1044 = vadd.f32 %v1010, %v1043
        %1045 = vmatmul.bf16.gmra.mxu0 %v499
        %v1046 = vpop.f32.mrf.mxu0
        %v1047 = vadd.f32 %v1013, %v1046
        %v1048 = vpop.f32.mrf.mxu0
        %v1049 = vadd.f32 %v1015, %v1048
        %1050 = vdwg.mxu0
        %1051 = vmatpush.bf16.msra.mxu0 %v840
        %1052 = vmatpush.bf16.msra.mxu0 %v839
        %1053 = vmatpush.bf16.msra.mxu0 %v838
        %1054 = vmatpush.bf16.msra.mxu0 %v837
        %1055 = vmatpush.bf16.msra.mxu0 %v836
        %1056 = vmatpush.bf16.msra.mxu0 %v835
        %1057 = vmatpush.bf16.msra.mxu0 %v834
        %1058 = vmatpush.bf16.msra.mxu0 %v833
        %1059 = vmatmul.bf16.gmra.mxu0 %v472
        %v1060 = vpop.f32.mrf.mxu0
        %v1061 = vadd.f32 %v1027, %v1060
        %v1062 = vpop.f32.mrf.mxu0
        %v1063 = vadd.f32 %v1029, %v1062
        %1064 = vmatmul.bf16.gmra.mxu0 %v479
        %v1065 = vpop.f32.mrf.mxu0
        %v1066 = vadd.f32 %v1032, %v1065
        %v1067 = vpop.f32.mrf.mxu0
        %v1068 = vadd.f32 %v1034, %v1067
        %1069 = vmatmul.bf16.gmra.mxu0 %v486
        %v1070 = vpop.f32.mrf.mxu0
        %v1071 = vadd.f32 %v1037, %v1070
        %v1072 = vpop.f32.mrf.mxu0
        %v1073 = vadd.f32 %v1039, %v1072
        %1074 = vmatmul.bf16.gmra.mxu0 %v493
        %v1075 = vpop.f32.mrf.mxu0
        %v1076 = vadd.f32 %v1042, %v1075
        %v1077 = vpop.f32.mrf.mxu0
        %v1078 = vadd.f32 %v1044, %v1077
        %1079 = vmatmul.bf16.gmra.mxu0 %v500
        %v1080 = vpop.f32.mrf.mxu0
        %v1081 = vadd.f32 %v1047, %v1080
        %v1082 = vpop.f32.mrf.mxu0
        %v1083 = vadd.f32 %v1049, %v1082
        %1084 = vdwg.mxu0
        %1085 = vmatpush.bf16.msra.mxu0 %v848
        %1086 = vmatpush.bf16.msra.mxu0 %v847
        %1087 = vmatpush.bf16.msra.mxu0 %v846
        %1088 = vmatpush.bf16.msra.mxu0 %v845
        %1089 = vmatpush.bf16.msra.mxu0 %v844
        %1090 = vmatpush.bf16.msra.mxu0 %v843
        %1091 = vmatpush.bf16.msra.mxu0 %v842
        %1092 = vmatpush.bf16.msra.mxu0 %v841
        %1093 = vmatmul.bf16.gmra.mxu0 %v473
        %v1094 = vpop.f32.mrf.mxu0
        %v1095 = vadd.f32 %v1061, %v1094
        %v1096 = vpop.f32.mrf.mxu0
        %v1097 = vadd.f32 %v1063, %v1096
        %1098 = vmatmul.bf16.gmra.mxu0 %v480
        %v1099 = vpop.f32.mrf.mxu0
        %v1100 = vadd.f32 %v1066, %v1099
        %v1101 = vpop.f32.mrf.mxu0
        %v1102 = vadd.f32 %v1068, %v1101
        %1103 = vmatmul.bf16.gmra.mxu0 %v487
        %v1104 = vpop.f32.mrf.mxu0
        %v1105 = vadd.f32 %v1071, %v1104
        %v1106 = vpop.f32.mrf.mxu0
        %v1107 = vadd.f32 %v1073, %v1106
        %1108 = vmatmul.bf16.gmra.mxu0 %v494
        %v1109 = vpop.f32.mrf.mxu0
        %v1110 = vadd.f32 %v1076, %v1109
        %v1111 = vpop.f32.mrf.mxu0
        %v1112 = vadd.f32 %v1078, %v1111
        %1113 = vmatmul.bf16.gmra.mxu0 %v501
        %v1114 = vpop.f32.mrf.mxu0
        %v1115 = vadd.f32 %v1081, %v1114
        %v1116 = vpop.f32.mrf.mxu0
        %v1117 = vadd.f32 %v1083, %v1116
        %1118 = vdwg.mxu0
        %1119 = vmatpush.bf16.msra.mxu0 0
        %1120 = vmatpush.bf16.msra.mxu0 0
        %1121 = vmatpush.bf16.msra.mxu0 0
        %1122 = vmatpush.bf16.msra.mxu0 0
        %1123 = vmatpush.bf16.msra.mxu0 0
        %1124 = vmatpush.bf16.msra.mxu0 0
        %1125 = vmatpush.bf16.msra.mxu0 0
        %1126 = vmatpush.bf16.msra.mxu0 %v849
        %1127 = vmatmul.bf16.gmra.mxu0 %v901
        %v1128 = vpop.f32.mrf.mxu0
        %v1129 = vadd.f32 %v1095, %v1128
        %v1130 = vpop.f32.mrf.mxu0
        %v1131 = vadd.f32 %v1097, %v1130
        %1132 = vmatmul.bf16.gmra.mxu0 %v904
        %v1133 = vpop.f32.mrf.mxu0
        %v1134 = vadd.f32 %v1100, %v1133
        %v1135 = vpop.f32.mrf.mxu0
        %v1136 = vadd.f32 %v1102, %v1135
        %1137 = vmatmul.bf16.gmra.mxu0 %v907
        %v1138 = vpop.f32.mrf.mxu0
        %v1139 = vadd.f32 %v1105, %v1138
        %v1140 = vpop.f32.mrf.mxu0
        %v1141 = vadd.f32 %v1107, %v1140
        %1142 = vmatmul.bf16.gmra.mxu0 %v910
        %v1143 = vpop.f32.mrf.mxu0
        %v1144 = vadd.f32 %v1110, %v1143
        %v1145 = vpop.f32.mrf.mxu0
        %v1146 = vadd.f32 %v1112, %v1145
        %1147 = vmatmul.bf16.gmra.mxu0 %v913
        %v1148 = vpop.f32.mrf.mxu0
        %v1149 = vadd.f32 %v1115, %v1148
        %v1150 = vpop.f32.mrf.mxu0
        %v1151 = vadd.f32 %v1117, %v1150
        %1152 = vdwg.mxu0
        %v1153 = vmul.f32 %v1129, 0.5
        %v1154 = vmul.f32 %v1131, 0.5
        %v1155 = vmul.f32 %v1134, 0.5
        %v1156 = vmul.f32 %v1136, 0.5
        %v1157 = vmul.f32 %v1139, 0.5
        %v1158 = vmul.f32 %v1141, 0.5
        %v1159 = vmul.f32 %v1144, 0.5
        %v1160 = vmul.f32 %v1146, 0.5
        %v1161 = vmul.f32 %v1149, 0.5
        %v1162 = vmul.f32 %v1151, 0.5
        %v1163 = vmul.f32 %v1129, %v1129
        %v1164 = vmul.f32 %v1131, %v1131
        %v1165 = vmul.f32 %v1134, %v1134
        %v1166 = vmul.f32 %v1136, %v1136
        %v1167 = vmul.f32 %v1139, %v1139
        %v1168 = vmul.f32 %v1141, %v1141
        %v1169 = vmul.f32 %v1144, %v1144
        %v1170 = vmul.f32 %v1146, %v1146
        %v1171 = vmul.f32 %v1149, %v1149
        %v1172 = vmul.f32 %v1151, %v1151
        %v1173 = vmul.f32 %v1163, %v1129
        %v1174 = vmul.f32 %v1164, %v1131
        %v1175 = vmul.f32 %v1165, %v1134
        %v1176 = vmul.f32 %v1166, %v1136
        %v1177 = vmul.f32 %v1167, %v1139
        %v1178 = vmul.f32 %v1168, %v1141
        %v1179 = vmul.f32 %v1169, %v1144
        %v1180 = vmul.f32 %v1170, %v1146
        %v1181 = vmul.f32 %v1171, %v1149
        %v1182 = vmul.f32 %v1172, %v1151
        %v1183 = vmul.f32 %v1173, 0.044715
        %v1184 = vmul.f32 %v1174, 0.044715
        %v1185 = vmul.f32 %v1175, 0.044715
        %v1186 = vmul.f32 %v1176, 0.044715
        %v1187 = vmul.f32 %v1177, 0.044715
        %v1188 = vmul.f32 %v1178, 0.044715
        %v1189 = vmul.f32 %v1179, 0.044715
        %v1190 = vmul.f32 %v1180, 0.044715
        %v1191 = vmul.f32 %v1181, 0.044715
        %v1192 = vmul.f32 %v1182, 0.044715
        %v1193 = vadd.f32 %v1129, %v1183
        %v1194 = vadd.f32 %v1131, %v1184
        %v1195 = vadd.f32 %v1134, %v1185
        %v1196 = vadd.f32 %v1136, %v1186
        %v1197 = vadd.f32 %v1139, %v1187
        %v1198 = vadd.f32 %v1141, %v1188
        %v1199 = vadd.f32 %v1144, %v1189
        %v1200 = vadd.f32 %v1146, %v1190
        %v1201 = vadd.f32 %v1149, %v1191
        %v1202 = vadd.f32 %v1151, %v1192
        %v1203 = vmul.f32 %v1193, 0.7978846
        %v1204 = vmul.f32 %v1194, 0.7978846
        %v1205 = vmul.f32 %v1195, 0.7978846
        %v1206 = vmul.f32 %v1196, 0.7978846
        %v1207 = vmul.f32 %v1197, 0.7978846
        %v1208 = vmul.f32 %v1198, 0.7978846
        %v1209 = vmul.f32 %v1199, 0.7978846
        %v1210 = vmul.f32 %v1200, 0.7978846
        %v1211 = vmul.f32 %v1201, 0.7978846
        %v1212 = vmul.f32 %v1202, 0.7978846
        %v1213 = vtanh.pop %v1203
        %v1214 = vtanh.pop %v1204
        %v1215 = vtanh.pop %v1205
        %v1216 = vtanh.pop %v1206
        %v1217 = vtanh.pop %v1207
        %v1218 = vtanh.pop %v1208
        %v1219 = vtanh.pop %v1209
        %v1220 = vtanh.pop %v1210
        %v1221 = vtanh.pop %v1211
        %v1222 = vtanh.pop %v1212
        %v1223 = vadd.f32 %v1213, 1.0
        %v1224 = vadd.f32 %v1214, 1.0
        %v1225 = vadd.f32 %v1215, 1.0
        %v1226 = vadd.f32 %v1216, 1.0
        %v1227 = vadd.f32 %v1217, 1.0
        %v1228 = vadd.f32 %v1218, 1.0
        %v1229 = vadd.f32 %v1219, 1.0
        %v1230 = vadd.f32 %v1220, 1.0
        %v1231 = vadd.f32 %v1221, 1.0
        %v1232 = vadd.f32 %v1222, 1.0
        %v1233 = vmul.f32 %v1153, %v1223
        %v1234 = vmul.f32 %v1154, %v1224
        %v1235 = vmul.f32 %v1155, %v1225
        %v1236 = vmul.f32 %v1156, %v1226
        %v1237 = vmul.f32 %v1157, %v1227
        %v1238 = vmul.f32 %v1158, %v1228
        %v1239 = vmul.f32 %v1159, %v1229
        %v1240 = vmul.f32 %v1160, %v1230
        %v1241 = vmul.f32 %v1161, %v1231
        %v1242 = vmul.f32 %v1162, %v1232
        %v1243 = vpack.c.bf16 %v1234, %v1233
        %v1244 = vpack.c.bf16 %v1236, %v1235
        %v1245 = vpack.c.bf16 %v1238, %v1237
        %v1246 = vpack.c.bf16 %v1240, %v1239
        %v1247 = vpack.c.bf16 %v1242, %v1241
        %v1248 = vld [vmem:[#allocation8] sm:$0xf]
        %v1249 = vld [vmem:[#allocation8 + $0x4] sm:$0xf]
        %v1250 = vld [vmem:[#allocation8 + $0x8] sm:$0xf]
        %v1251 = vld [vmem:[#allocation8 + $0xc] sm:$0xf]
        %v1252 = vld [vmem:[#allocation8 + $0x10] sm:$0xf]
        %v1253 = vld [vmem:[#allocation8 + $0x14] sm:$0xf]
        %v1254 = vld [vmem:[#allocation8 + $0x18] sm:$0xf]
        %v1255 = vld [vmem:[#allocation8 + $0x1c] sm:$0xf]
        %v1256 = vld [vmem:[#allocation8 + $0x20] sm:$0xf]
        %v1257 = vld [vmem:[#allocation8 + $0x24] sm:$0xf]
        %v1258 = vld [vmem:[#allocation8 + $0x28] sm:$0xf]
        %v1259 = vld [vmem:[#allocation8 + $0x2c] sm:$0xf]
        %v1260 = vld [vmem:[#allocation8 + $0x30] sm:$0xf]
        %v1261 = vld [vmem:[#allocation8 + $0x34] sm:$0xf]
        %v1262 = vld [vmem:[#allocation8 + $0x38] sm:$0xf]
        %v1263 = vld [vmem:[#allocation8 + $0x3c] sm:$0xf]
        %v1264 = vld [vmem:[#allocation10] sm:$0x1]
        %v1266 = vperm.slane %v1264, 0
        %v1284 = vunpack.c.l.b16 %v1248
        %v1285 = vunpack.c.l.b16 %v1249
        %v1286 = vunpack.c.l.b16 %v1250
        %v1287 = vunpack.c.l.b16 %v1251
        %v1288 = vunpack.c.l.b16 %v1252
        %v1289 = vunpack.c.l.b16 %v1253
        %v1290 = vunpack.c.l.b16 %v1254
        %v1291 = vunpack.c.l.b16 %v1255
        %v1292 = vunpack.c.l.b16 %v1256
        %v1293 = vunpack.c.l.b16 %v1257
        %v1294 = vunpack.c.l.b16 %v1258
        %v1295 = vunpack.c.l.b16 %v1259
        %v1296 = vunpack.c.l.b16 %v1260
        %v1297 = vunpack.c.l.b16 %v1261
        %v1298 = vunpack.c.l.b16 %v1262
        %v1299 = vunpack.c.l.b16 %v1263
        %v1300 = vpack.c.b16 %v1285, %v1284
        %v1301 = vpack.c.b16 %v1287, %v1286
        %v1302 = vpack.c.b16 %v1289, %v1288
        %v1303 = vpack.c.b16 %v1291, %v1290
        %v1304 = vpack.c.b16 %v1293, %v1292
        %v1305 = vpack.c.b16 %v1295, %v1294
        %v1306 = vpack.c.b16 %v1297, %v1296
        %v1307 = vpack.c.b16 %v1299, %v1298
        %1316 = vmatpush.bf16.msra.mxu0 %v1307
        %1317 = vmatpush.bf16.msra.mxu0 %v1306
        %1318 = vmatpush.bf16.msra.mxu0 %v1305
        %1319 = vmatpush.bf16.msra.mxu0 %v1304
        %1320 = vmatpush.bf16.msra.mxu0 %v1303
        %1321 = vmatpush.bf16.msra.mxu0 %v1302
        %1322 = vmatpush.bf16.msra.mxu0 %v1301
        %1323 = vmatpush.bf16.msra.mxu0 %v1300
        %1324 = vmatmul.bf16.gmra.mxu0 %v1243
        %v1325 = vpop.f32.mrf.mxu0
        %v1326 = vadd.f32 %v1266, %v1325
        %v1327 = vpop.f32.mrf.mxu0
        %v1328 = vadd.f32 %v1266, %v1327
        %1329 = vmatmul.bf16.gmra.mxu0 %v1244
        %v1330 = vpop.f32.mrf.mxu0
        %v1331 = vadd.f32 %v1266, %v1330
        %v1332 = vpop.f32.mrf.mxu0
        %v1333 = vadd.f32 %v1266, %v1332
        %1334 = vmatmul.bf16.gmra.mxu0 %v1245
        %v1335 = vpop.f32.mrf.mxu0
        %v1336 = vadd.f32 %v1266, %v1335
        %v1337 = vpop.f32.mrf.mxu0
        %v1338 = vadd.f32 %v1266, %v1337
        %1339 = vmatmul.bf16.gmra.mxu0 %v1246
        %v1340 = vpop.f32.mrf.mxu0
        %v1341 = vadd.f32 %v1266, %v1340
        %v1342 = vpop.f32.mrf.mxu0
        %v1343 = vadd.f32 %v1266, %v1342
        %1344 = vmatmul.bf16.gmra.mxu0 %v1247
        %v1345 = vpop.f32.mrf.mxu0
        %v1346 = vadd.f32 %v1266, %v1345
        %v1347 = vpop.f32.mrf.mxu0
        %v1348 = vadd.f32 %v1266, %v1347
        %1349 = vdwg.mxu0
        %v1350 = vadd.f32 %v1326, %v1233
        %v1351 = vadd.f32 %v1328, %v1234
        %v1352 = vadd.f32 %v1331, %v1235
        %v1353 = vadd.f32 %v1333, %v1236
        %v1354 = vadd.f32 %v1336, %v1237
        %v1355 = vadd.f32 %v1338, %v1238
        %v1356 = vadd.f32 %v1341, %v1239
        %v1357 = vadd.f32 %v1343, %v1240
        %v1358 = vadd.f32 %v1346, %v1241
        %v1359 = vadd.f32 %v1348, %v1242
        %v1360 = vmul.f32 %v1350, 0.5
        %v1361 = vmul.f32 %v1351, 0.5
        %v1362 = vmul.f32 %v1352, 0.5
        %v1363 = vmul.f32 %v1353, 0.5
        %v1364 = vmul.f32 %v1354, 0.5
        %v1365 = vmul.f32 %v1355, 0.5
        %v1366 = vmul.f32 %v1356, 0.5
        %v1367 = vmul.f32 %v1357, 0.5
        %v1368 = vmul.f32 %v1358, 0.5
        %v1369 = vmul.f32 %v1359, 0.5
        %v1370 = vmul.f32 %v1350, %v1350
        %v1371 = vmul.f32 %v1351, %v1351
        %v1372 = vmul.f32 %v1352, %v1352
        %v1373 = vmul.f32 %v1353, %v1353
        %v1374 = vmul.f32 %v1354, %v1354
        %v1375 = vmul.f32 %v1355, %v1355
        %v1376 = vmul.f32 %v1356, %v1356
        %v1377 = vmul.f32 %v1357, %v1357
        %v1378 = vmul.f32 %v1358, %v1358
        %v1379 = vmul.f32 %v1359, %v1359
        %v1380 = vmul.f32 %v1370, %v1350
        %v1381 = vmul.f32 %v1371, %v1351
        %v1382 = vmul.f32 %v1372, %v1352
        %v1383 = vmul.f32 %v1373, %v1353
        %v1384 = vmul.f32 %v1374, %v1354
        %v1385 = vmul.f32 %v1375, %v1355
        %v1386 = vmul.f32 %v1376, %v1356
        %v1387 = vmul.f32 %v1377, %v1357
        %v1388 = vmul.f32 %v1378, %v1358
        %v1389 = vmul.f32 %v1379, %v1359
        %v1390 = vmul.f32 %v1380, 0.044715
        %v1391 = vmul.f32 %v1381, 0.044715
        %v1392 = vmul.f32 %v1382, 0.044715
        %v1393 = vmul.f32 %v1383, 0.044715
        %v1394 = vmul.f32 %v1384, 0.044715
        %v1395 = vmul.f32 %v1385, 0.044715
        %v1396 = vmul.f32 %v1386, 0.044715
        %v1397 = vmul.f32 %v1387, 0.044715
        %v1398 = vmul.f32 %v1388, 0.044715
        %v1399 = vmul.f32 %v1389, 0.044715
        %v1400 = vadd.f32 %v1350, %v1390
        %v1401 = vadd.f32 %v1351, %v1391
        %v1402 = vadd.f32 %v1352, %v1392
        %v1403 = vadd.f32 %v1353, %v1393
        %v1404 = vadd.f32 %v1354, %v1394
        %v1405 = vadd.f32 %v1355, %v1395
        %v1406 = vadd.f32 %v1356, %v1396
        %v1407 = vadd.f32 %v1357, %v1397
        %v1408 = vadd.f32 %v1358, %v1398
        %v1409 = vadd.f32 %v1359, %v1399
        %v1410 = vmul.f32 %v1400, 0.7978846
        %v1411 = vmul.f32 %v1401, 0.7978846
        %v1412 = vmul.f32 %v1402, 0.7978846
        %v1413 = vmul.f32 %v1403, 0.7978846
        %v1414 = vmul.f32 %v1404, 0.7978846
        %v1415 = vmul.f32 %v1405, 0.7978846
        %v1416 = vmul.f32 %v1406, 0.7978846
        %v1417 = vmul.f32 %v1407, 0.7978846
        %v1418 = vmul.f32 %v1408, 0.7978846
        %v1419 = vmul.f32 %v1409, 0.7978846
        %v1420 = vtanh.pop %v1410
        %v1421 = vtanh.pop %v1411
        %v1422 = vtanh.pop %v1412
        %v1423 = vtanh.pop %v1413
        %v1424 = vtanh.pop %v1414
        %v1425 = vtanh.pop %v1415
        %v1426 = vtanh.pop %v1416
        %v1427 = vtanh.pop %v1417
        %v1428 = vtanh.pop %v1418
        %v1429 = vtanh.pop %v1419
        %v1430 = vadd.f32 %v1420, 1.0
        %v1431 = vadd.f32 %v1421, 1.0
        %v1432 = vadd.f32 %v1422, 1.0
        %v1433 = vadd.f32 %v1423, 1.0
        %v1434 = vadd.f32 %v1424, 1.0
        %v1435 = vadd.f32 %v1425, 1.0
        %v1436 = vadd.f32 %v1426, 1.0
        %v1437 = vadd.f32 %v1427, 1.0
        %v1438 = vadd.f32 %v1428, 1.0
        %v1439 = vadd.f32 %v1429, 1.0
        %v1440 = vmul.f32 %v1360, %v1430
        %v1441 = vmul.f32 %v1361, %v1431
        %v1442 = vmul.f32 %v1362, %v1432
        %v1443 = vmul.f32 %v1363, %v1433
        %v1444 = vmul.f32 %v1364, %v1434
        %v1445 = vmul.f32 %v1365, %v1435
        %v1446 = vmul.f32 %v1366, %v1436
        %v1447 = vmul.f32 %v1367, %v1437
        %v1448 = vmul.f32 %v1368, %v1438
        %v1449 = vmul.f32 %v1369, %v1439
        %v1450 = vpack.c.bf16 %v1441, %v1440
        %v1451 = vpack.c.bf16 %v1443, %v1442
        %v1452 = vpack.c.bf16 %v1445, %v1444
        %v1453 = vpack.c.bf16 %v1447, %v1446
        %v1454 = vpack.c.bf16 %v1449, %v1448
        %s1455 = scalar_lea.vmem [#allocation8], 64
        %v1456 = vld [vmem:[%s1455] sm:$0xf]
        %v1457 = vld [vmem:[%s1455 + $0x4] sm:$0xf]
        %v1458 = vld [vmem:[%s1455 + $0x8] sm:$0xf]
        %v1459 = vld [vmem:[%s1455 + $0xc] sm:$0xf]
        %v1460 = vld [vmem:[%s1455 + $0x10] sm:$0xf]
        %v1461 = vld [vmem:[%s1455 + $0x14] sm:$0xf]
        %v1462 = vld [vmem:[%s1455 + $0x18] sm:$0xf]
        %v1463 = vld [vmem:[%s1455 + $0x1c] sm:$0xf]
        %v1464 = vld [vmem:[%s1455 + $0x20] sm:$0xf]
        %v1465 = vld [vmem:[%s1455 + $0x24] sm:$0xf]
        %v1466 = vld [vmem:[%s1455 + $0x28] sm:$0xf]
        %v1467 = vld [vmem:[%s1455 + $0x2c] sm:$0xf]
        %v1468 = vld [vmem:[%s1455 + $0x30] sm:$0xf]
        %v1469 = vld [vmem:[%s1455 + $0x34] sm:$0xf]
        %v1470 = vld [vmem:[%s1455 + $0x38] sm:$0xf]
        %v1471 = vld [vmem:[%s1455 + $0x3c] sm:$0xf]
        %s1472 = scalar_lea.vmem [#allocation10], 1
        %v1473 = vld [vmem:[%s1472] sm:$0x1]
        %v1475 = vperm.slane %v1473, 0
        %v1493 = vunpack.c.l.b16 %v1456
        %v1494 = vunpack.c.l.b16 %v1457
        %v1495 = vunpack.c.l.b16 %v1458
        %v1496 = vunpack.c.l.b16 %v1459
        %v1497 = vunpack.c.l.b16 %v1460
        %v1498 = vunpack.c.l.b16 %v1461
        %v1499 = vunpack.c.l.b16 %v1462
        %v1500 = vunpack.c.l.b16 %v1463
        %v1501 = vunpack.c.l.b16 %v1464
        %v1502 = vunpack.c.l.b16 %v1465
        %v1503 = vunpack.c.l.b16 %v1466
        %v1504 = vunpack.c.l.b16 %v1467
        %v1505 = vunpack.c.l.b16 %v1468
        %v1506 = vunpack.c.l.b16 %v1469
        %v1507 = vunpack.c.l.b16 %v1470
        %v1508 = vunpack.c.l.b16 %v1471
        %v1509 = vpack.c.b16 %v1494, %v1493
        %v1510 = vpack.c.b16 %v1496, %v1495
        %v1511 = vpack.c.b16 %v1498, %v1497
        %v1512 = vpack.c.b16 %v1500, %v1499
        %v1513 = vpack.c.b16 %v1502, %v1501
        %v1514 = vpack.c.b16 %v1504, %v1503
        %v1515 = vpack.c.b16 %v1506, %v1505
        %v1516 = vpack.c.b16 %v1508, %v1507
        %1525 = vmatpush.bf16.msra.mxu0 %v1516
        %1526 = vmatpush.bf16.msra.mxu0 %v1515
        %1527 = vmatpush.bf16.msra.mxu0 %v1514
        %1528 = vmatpush.bf16.msra.mxu0 %v1513
        %1529 = vmatpush.bf16.msra.mxu0 %v1512
        %1530 = vmatpush.bf16.msra.mxu0 %v1511
        %1531 = vmatpush.bf16.msra.mxu0 %v1510
        %1532 = vmatpush.bf16.msra.mxu0 %v1509
        %1533 = vmatmul.bf16.gmra.mxu0 %v1450
        %v1534 = vpop.f32.mrf.mxu0
        %v1535 = vadd.f32 %v1475, %v1534
        %v1536 = vpop.f32.mrf.mxu0
        %v1537 = vadd.f32 %v1475, %v1536
        %1538 = vmatmul.bf16.gmra.mxu0 %v1451
        %v1539 = vpop.f32.mrf.mxu0
        %v1540 = vadd.f32 %v1475, %v1539
        %v1541 = vpop.f32.mrf.mxu0
        %v1542 = vadd.f32 %v1475, %v1541
        %1543 = vmatmul.bf16.gmra.mxu0 %v1452
        %v1544 = vpop.f32.mrf.mxu0
        %v1545 = vadd.f32 %v1475, %v1544
        %v1546 = vpop.f32.mrf.mxu0
        %v1547 = vadd.f32 %v1475, %v1546
        %1548 = vmatmul.bf16.gmra.mxu0 %v1453
        %v1549 = vpop.f32.mrf.mxu0
        %v1550 = vadd.f32 %v1475, %v1549
        %v1551 = vpop.f32.mrf.mxu0
        %v1552 = vadd.f32 %v1475, %v1551
        %1553 = vmatmul.bf16.gmra.mxu0 %v1454
        %v1554 = vpop.f32.mrf.mxu0
        %v1555 = vadd.f32 %v1475, %v1554
        %v1556 = vpop.f32.mrf.mxu0
        %v1557 = vadd.f32 %v1475, %v1556
        %1558 = vdwg.mxu0
        %v1559 = vadd.f32 %v1535, %v1440
        %v1560 = vadd.f32 %v1537, %v1441
        %v1561 = vadd.f32 %v1540, %v1442
        %v1562 = vadd.f32 %v1542, %v1443
        %v1563 = vadd.f32 %v1545, %v1444
        %v1564 = vadd.f32 %v1547, %v1445
        %v1565 = vadd.f32 %v1550, %v1446
        %v1566 = vadd.f32 %v1552, %v1447
        %v1567 = vadd.f32 %v1555, %v1448
        %v1568 = vadd.f32 %v1557, %v1449
        %v1569 = vmul.f32 %v1559, 0.5
        %v1570 = vmul.f32 %v1560, 0.5
        %v1571 = vmul.f32 %v1561, 0.5
        %v1572 = vmul.f32 %v1562, 0.5
        %v1573 = vmul.f32 %v1563, 0.5
        %v1574 = vmul.f32 %v1564, 0.5
        %v1575 = vmul.f32 %v1565, 0.5
        %v1576 = vmul.f32 %v1566, 0.5
        %v1577 = vmul.f32 %v1567, 0.5
        %v1578 = vmul.f32 %v1568, 0.5
        %v1579 = vmul.f32 %v1559, %v1559
        %v1580 = vmul.f32 %v1560, %v1560
        %v1581 = vmul.f32 %v1561, %v1561
        %v1582 = vmul.f32 %v1562, %v1562
        %v1583 = vmul.f32 %v1563, %v1563
        %v1584 = vmul.f32 %v1564, %v1564
        %v1585 = vmul.f32 %v1565, %v1565
        %v1586 = vmul.f32 %v1566, %v1566
        %v1587 = vmul.f32 %v1567, %v1567
        %v1588 = vmul.f32 %v1568, %v1568
        %v1589 = vmul.f32 %v1579, %v1559
        %v1590 = vmul.f32 %v1580, %v1560
        %v1591 = vmul.f32 %v1581, %v1561
        %v1592 = vmul.f32 %v1582, %v1562
        %v1593 = vmul.f32 %v1583, %v1563
        %v1594 = vmul.f32 %v1584, %v1564
        %v1595 = vmul.f32 %v1585, %v1565
        %v1596 = vmul.f32 %v1586, %v1566
        %v1597 = vmul.f32 %v1587, %v1567
        %v1598 = vmul.f32 %v1588, %v1568
        %v1599 = vmul.f32 %v1589, 0.044715
        %v1600 = vmul.f32 %v1590, 0.044715
        %v1601 = vmul.f32 %v1591, 0.044715
        %v1602 = vmul.f32 %v1592, 0.044715
        %v1603 = vmul.f32 %v1593, 0.044715
        %v1604 = vmul.f32 %v1594, 0.044715
        %v1605 = vmul.f32 %v1595, 0.044715
        %v1606 = vmul.f32 %v1596, 0.044715
        %v1607 = vmul.f32 %v1597, 0.044715
        %v1608 = vmul.f32 %v1598, 0.044715
        %v1609 = vadd.f32 %v1559, %v1599
        %v1610 = vadd.f32 %v1560, %v1600
        %v1611 = vadd.f32 %v1561, %v1601
        %v1612 = vadd.f32 %v1562, %v1602
        %v1613 = vadd.f32 %v1563, %v1603
        %v1614 = vadd.f32 %v1564, %v1604
        %v1615 = vadd.f32 %v1565, %v1605
        %v1616 = vadd.f32 %v1566, %v1606
        %v1617 = vadd.f32 %v1567, %v1607
        %v1618 = vadd.f32 %v1568, %v1608
        %v1619 = vmul.f32 %v1609, 0.7978846
        %v1620 = vmul.f32 %v1610, 0.7978846
        %v1621 = vmul.f32 %v1611, 0.7978846
        %v1622 = vmul.f32 %v1612, 0.7978846
        %v1623 = vmul.f32 %v1613, 0.7978846
        %v1624 = vmul.f32 %v1614, 0.7978846
        %v1625 = vmul.f32 %v1615, 0.7978846
        %v1626 = vmul.f32 %v1616, 0.7978846
        %v1627 = vmul.f32 %v1617, 0.7978846
        %v1628 = vmul.f32 %v1618, 0.7978846
        %v1629 = vtanh.pop %v1619
        %v1630 = vtanh.pop %v1620
        %v1631 = vtanh.pop %v1621
        %v1632 = vtanh.pop %v1622
        %v1633 = vtanh.pop %v1623
        %v1634 = vtanh.pop %v1624
        %v1635 = vtanh.pop %v1625
        %v1636 = vtanh.pop %v1626
        %v1637 = vtanh.pop %v1627
        %v1638 = vtanh.pop %v1628
        %v1639 = vadd.f32 %v1629, 1.0
        %v1640 = vadd.f32 %v1630, 1.0
        %v1641 = vadd.f32 %v1631, 1.0
        %v1642 = vadd.f32 %v1632, 1.0
        %v1643 = vadd.f32 %v1633, 1.0
        %v1644 = vadd.f32 %v1634, 1.0
        %v1645 = vadd.f32 %v1635, 1.0
        %v1646 = vadd.f32 %v1636, 1.0
        %v1647 = vadd.f32 %v1637, 1.0
        %v1648 = vadd.f32 %v1638, 1.0
        %v1649 = vmul.f32 %v1569, %v1639
        %v1650 = vmul.f32 %v1570, %v1640
        %v1651 = vmul.f32 %v1571, %v1641
        %v1652 = vmul.f32 %v1572, %v1642
        %v1653 = vmul.f32 %v1573, %v1643
        %v1654 = vmul.f32 %v1574, %v1644
        %v1655 = vmul.f32 %v1575, %v1645
        %v1656 = vmul.f32 %v1576, %v1646
        %v1657 = vmul.f32 %v1577, %v1647
        %v1658 = vmul.f32 %v1578, %v1648
        %v1659 = vpack.c.bf16 %v1650, %v1649
        %v1660 = vpack.c.bf16 %v1652, %v1651
        %v1661 = vpack.c.bf16 %v1654, %v1653
        %v1662 = vpack.c.bf16 %v1656, %v1655
        %v1663 = vpack.c.bf16 %v1658, %v1657
        %v1664 = vld [vmem:[#allocation11] sm:$0xf]
        %v1665 = vld [vmem:[#allocation11 + $0x4] sm:$0xf]
        %v1666 = vld [vmem:[#allocation11 + $0x8] sm:$0xf]
        %v1667 = vld [vmem:[#allocation11 + $0xc] sm:$0xf]
        %v1668 = vld [vmem:[#allocation11 + $0x10] sm:$0xf]
        %v1669 = vld [vmem:[#allocation11 + $0x14] sm:$0xf]
        %v1670 = vld [vmem:[#allocation11 + $0x18] sm:$0xf]
        %v1671 = vld [vmem:[#allocation11 + $0x1c] sm:$0xf]
        %v1672 = vld [vmem:[#allocation11 + $0x20] sm:$0xf]
        %v1673 = vld [vmem:[#allocation11 + $0x24] sm:$0xf]
        %v1674 = vld [vmem:[#allocation11 + $0x28] sm:$0xf]
        %v1675 = vld [vmem:[#allocation11 + $0x2c] sm:$0xf]
        %v1676 = vld [vmem:[#allocation11 + $0x30] sm:$0xf]
        %v1677 = vld [vmem:[#allocation11 + $0x34] sm:$0xf]
        %v1678 = vld [vmem:[#allocation11 + $0x38] sm:$0xf]
        %v1679 = vld [vmem:[#allocation11 + $0x3c] sm:$0xf]
        %v1680 = vld [vmem:[#allocation13] sm:$0x1]
        %v1682 = vperm.slane %v1680, 0
        %v1700 = vunpack.c.l.b16 %v1664
        %v1701 = vunpack.c.l.b16 %v1665
        %v1702 = vunpack.c.l.b16 %v1666
        %v1703 = vunpack.c.l.b16 %v1667
        %v1704 = vunpack.c.l.b16 %v1668
        %v1705 = vunpack.c.l.b16 %v1669
        %v1706 = vunpack.c.l.b16 %v1670
        %v1707 = vunpack.c.l.b16 %v1671
        %v1708 = vunpack.c.l.b16 %v1672
        %v1709 = vunpack.c.l.b16 %v1673
        %v1710 = vunpack.c.l.b16 %v1674
        %v1711 = vunpack.c.l.b16 %v1675
        %v1712 = vunpack.c.l.b16 %v1676
        %v1713 = vunpack.c.l.b16 %v1677
        %v1714 = vunpack.c.l.b16 %v1678
        %v1715 = vunpack.c.l.b16 %v1679
        %v1716 = vpack.c.b16 %v1701, %v1700
        %v1717 = vpack.c.b16 %v1703, %v1702
        %v1718 = vpack.c.b16 %v1705, %v1704
        %v1719 = vpack.c.b16 %v1707, %v1706
        %v1720 = vpack.c.b16 %v1709, %v1708
        %v1721 = vpack.c.b16 %v1711, %v1710
        %v1722 = vpack.c.b16 %v1713, %v1712
        %v1723 = vpack.c.b16 %v1715, %v1714
        %1732 = vmatpush.bf16.msra.mxu0 %v1723
        %1733 = vmatpush.bf16.msra.mxu0 %v1722
        %1734 = vmatpush.bf16.msra.mxu0 %v1721
        %1735 = vmatpush.bf16.msra.mxu0 %v1720
        %1736 = vmatpush.bf16.msra.mxu0 %v1719
        %1737 = vmatpush.bf16.msra.mxu0 %v1718
        %1738 = vmatpush.bf16.msra.mxu0 %v1717
        %1739 = vmatpush.bf16.msra.mxu0 %v1716
        %1740 = vmatmul.bf16.gmra.mxu0 %v1659
        %v1741 = vpop.f32.mrf.mxu0
        %v1742 = vadd.f32 %v1682, %v1741
        %v1743 = vpop.f32.mrf.mxu0
        %v1744 = vadd.f32 %v1682, %v1743
        %1745 = vmatmul.bf16.gmra.mxu0 %v1660
        %v1746 = vpop.f32.mrf.mxu0
        %v1747 = vadd.f32 %v1682, %v1746
        %v1748 = vpop.f32.mrf.mxu0
        %v1749 = vadd.f32 %v1682, %v1748
        %1750 = vmatmul.bf16.gmra.mxu0 %v1661
        %v1751 = vpop.f32.mrf.mxu0
        %v1752 = vadd.f32 %v1682, %v1751
        %v1753 = vpop.f32.mrf.mxu0
        %v1754 = vadd.f32 %v1682, %v1753
        %1755 = vmatmul.bf16.gmra.mxu0 %v1662
        %v1756 = vpop.f32.mrf.mxu0
        %v1757 = vadd.f32 %v1682, %v1756
        %v1758 = vpop.f32.mrf.mxu0
        %v1759 = vadd.f32 %v1682, %v1758
        %1760 = vmatmul.bf16.gmra.mxu0 %v1663
        %v1761 = vpop.f32.mrf.mxu0
        %v1762 = vadd.f32 %v1682, %v1761
        %v1763 = vpop.f32.mrf.mxu0
        %v1764 = vadd.f32 %v1682, %v1763
        %1765 = vdwg.mxu0
        %v1766 = vpack.c.bf16 %v1742, %v1742
        %v1767 = vpack.c.bf16 %v1744, %v1744
        %v1768 = vpack.c.bf16 %v1747, %v1747
        %v1769 = vpack.c.bf16 %v1749, %v1749
        %v1770 = vpack.c.bf16 %v1752, %v1752
        %v1771 = vpack.c.bf16 %v1754, %v1754
        %v1772 = vpack.c.bf16 %v1757, %v1757
        %v1773 = vpack.c.bf16 %v1759, %v1759
        %v1774 = vpack.c.bf16 %v1762, %v1762
        %v1775 = vpack.c.bf16 %v1764, %v1764
        %1776 = vst [vmem:[%s394] sm:$0xf] %v1766
        %1777 = vst [vmem:[%s394 + $0x4] sm:$0xf] %v1767
        %1778 = vst [vmem:[%s394 + $0x8] sm:$0xf] %v1768
        %1779 = vst [vmem:[%s394 + $0xc] sm:$0xf] %v1769
        %1780 = vst [vmem:[%s394 + $0x10] sm:$0xf] %v1770
        %1781 = vst [vmem:[%s394 + $0x14] sm:$0xf] %v1771
        %1782 = vst [vmem:[%s394 + $0x18] sm:$0xf] %v1772
        %1783 = vst [vmem:[%s394 + $0x1c] sm:$0xf] %v1773
        %1784 = vst [vmem:[%s394 + $0x20] sm:$0xf] %v1774
        %1785 = vst [vmem:[%s394 + $0x24] sm:$0xf] %v1775
        %s1786 = sand.u32 %s187, 1
        %s1787 = scalar_lea.sflag [#allocation4], %s1786
        %s1788 = sand.u32 %s187, 1
        %s1789 = smul.addr %s1788, 40
        %s1790 = scalar_lea.vmem [#allocation14], %s1789
        // Predicated region
        $region77: #{tpu_custom_call.1} parent=47 // pred_check
          %p1791 = pneg %p197
        $region78: #{tpu_custom_call.1} parent=47 // pred_check_branch
          %1793 = sbr.rel (%p1791) target = $region80
        $region79: #{tpu_custom_call.1} parent=47 // pred_region
          %s1794 = smul.u32 10, %s27
          %1796 = vsyncadd %s1787, 0
          %s1797 = smul.addr %s1794, 4
          %s1798 = scalar_lea.hbm %s7, %s1797
          %s1799 = sshll.u32 %s1790, 4
          %s1800 = int_to_ptr.vmem [resolvable:$true] %s1799
          %s1801 = sshll.u32 %s1798, 4
          %s1802 = int_to_ptr.hbm [resolvable:$true] %s1801
          %1807 = dma.vmem_to_hbm [thread:$0]  %s1800, 640, %s1802, %s1787, 64, 64, 4
        $region80: #{tpu_custom_call.1} parent=47 // pred_fallthru
          _
      $region48: #{tpu_custom_call.1} parent=5 // pred_fallthru
        _
      %p1808 = scmp.le.s32.totalorder 2, %s22
      // Predicated region
      $region81: #{tpu_custom_call.1} parent=5 // pred_check
        %p1809 = pneg %p1808
      $region82: #{tpu_custom_call.1} parent=5 // pred_check_branch
        %1811 = sbr.rel (%p1809) target = $region84
      $region83: #{tpu_custom_call.1} parent=5 // pred_region
        %s1812 = ssub.s32 %s22, 2
        // Predicated region
        $region85: #{tpu_custom_call.1} parent=83 // pred_check
          %p1813 = pneg %p203
        $region86: #{tpu_custom_call.1} parent=83 // pred_check_branch
          %1815 = sbr.rel (%p1813) target = $region88
        $region87: #{tpu_custom_call.1} parent=83 // pred_region
          %s1816 = sand.u32 %s188, 1
          %s1817 = scalar_lea.sflag [#allocation4], %s1816
          %s1818 = sand.u32 %s188, 1
          %s1819 = smul.addr %s1818, 40
          %s1820 = scalar_lea.vmem [#allocation14], %s1819
          %1822 = dma.done %s1817, 640
        $region88: #{tpu_custom_call.1} parent=83 // pred_fallthru
          _
      $region84: #{tpu_custom_call.1} parent=5 // pred_fallthru
        _
    $region6: #{tpu_custom_call.1} parent=1 // loop_footer
      %s26 = sadd.s32 1, %s22
    $region7: #{tpu_custom_call.1} parent=1 // loop_footer_branch
      %21 = sbr.rel target = $region3
    $region8: #{tpu_custom_call.1} parent=1 // loop_exit
      _
    %1823 = vsyncpa [#allocation3], 1
    %s1824 = scalar_lea.sflag [#allocation3], 1
    %1825 = vsyncpa %s1824, 1
    %1826 = vsyncpa [#allocation6], 1
    %1827 = vsyncpa [#allocation9], 1
    %1828 = vsyncpa [#allocation12], 1
    %1829 = vsyncpa [#allocation4], 1
    %s1830 = scalar_lea.sflag [#allocation4], 1
    %1831 = vsyncpa %s1830, 1

</llo_original>
